<compile_context>
chip_gen: v7x
topology: tpu7x:2x2x1
jax: 0.10.0
libtpu: 0.0.40
codegen_flags: <defaults>
</compile_context>

<pallas_src>
import jax
import jax.numpy as jnp
from jax.experimental import pallas as pl
from jax.experimental.pallas import tpu as pltpu


def se_block_kernel(x_ref, w1_ref, b1_ref, w2_ref, b2_ref, o_ref):
    # x_ref: (Nb, C, L) block spanning the full C and L extents for Nb rows.
    x = x_ref[...]                                              # I/O dtype
    nb, c, l = x.shape

    # --- squeeze: mean over L as a batched MXU contraction (fp32 accumulate) ---
    # Avoids materializing an fp32 copy of the whole block (bf16 path) and
    # keeps the L-reduction on the otherwise-idle MXU.
    ones_l = jnp.ones((nb, l, 1), dtype=x.dtype)
    x_sum = jnp.einsum("bcl,blo->bco", x, ones_l,
                       preferred_element_type=jnp.float32)      # (Nb, C, 1)
    x_sq = x_sum[..., 0] * (1.0 / l)                            # (Nb, C) fp32

    # --- excitation: Linear -> ReLU -> Linear -> Sigmoid (fp32) ---
    h = jnp.dot(x_sq, w1_ref[...], preferred_element_type=jnp.float32)
    h = jnp.maximum(h + b1_ref[...], 0.0)                       # (Nb, H)
    s = jnp.dot(h, w2_ref[...], preferred_element_type=jnp.float32)
    s = jax.nn.sigmoid(s + b2_ref[...])                         # (Nb, C)

    # --- scale: one broadcast per block, multiply in the I/O dtype ---
    o_ref[...] = (x * s.astype(x.dtype)[:, :, None]).astype(o_ref.dtype)


def _round_up(v, m):
    return ((v + m - 1) // m) * m


def _padded_tile_bytes(rows, cols, itemsize):
    """VMEM footprint of a 2-D (rows, cols) block after (sublane, 128) padding."""
    sublane = max(8, 32 // itemsize)          # 8 for f32, 16 for bf16, 32 for i8
    return _round_up(max(rows, 1), sublane) * _round_up(max(cols, 1), 128) * itemsize


def _physical_vmem_bytes():
    try:
        return int(pltpu.get_tpu_info().vmem_capacity_bytes)
    except Exception:
        return 64 << 20                       # conservative fallback (v7x per-TC)


def _choose_block_rows(N, row_bytes, row_vmem_bytes, budget_bytes, param_vmem_bytes,
                       target_block_bytes, min_block_bytes=1 << 20, min_grid_steps=8):
    # VMEM cap: double-buffered x block + double-buffered out block.
    avail = max(budget_bytes - param_vmem_bytes, 4 * row_vmem_bytes)
    nb_vmem = max(1, avail // (4 * row_vmem_bytes))
    # Bandwidth target: ~1-4 MiB per x block (85%+ of HBM roofline measured).
    nb_target = max(1, target_block_bytes // row_bytes)
    nb = int(min(N, nb_vmem, nb_target))
    # Prefer >= min_grid_steps grid steps (pipelining + v7x megacore sharding),
    # but never shrink blocks below min_block_bytes to get them.
    if pl.cdiv(N, nb) < min_grid_steps:
        nb_steps = max(1, pl.cdiv(N, min_grid_steps))
        if nb_steps * row_bytes >= min_block_bytes:
            nb = min(nb, nb_steps)
    return max(1, int(nb))


def se_block(x, w1, b1, w2, b2, *, block_rows=None, vmem_budget_bytes=None,
             target_block_bytes=2 << 20):
    """x: (N, C, L); w1: (C, H); w2: (H, C); b1: (H,) or (1, H); b2: (C,) or (1, C)."""
    N, C, L = x.shape
    H = w1.shape[1]
    assert w1.shape == (C, H) and w2.shape == (H, C), "weights must be (in, out)"
    b1 = jnp.reshape(b1, (1, H))
    b2 = jnp.reshape(b2, (1, C))

    x_item = jnp.dtype(x.dtype).itemsize
    w_item = jnp.dtype(w1.dtype).itemsize
    b_item = jnp.dtype(b1.dtype).itemsize

    # --- VMEM accounting (lane/sublane-padded; params double-buffered) ---
    row_bytes = C * L * x_item                      # HBM bytes per batch row
    row_vmem = _padded_tile_bytes(C, L, x_item)     # VMEM bytes per batch row
    param_vmem = 2 * (_padded_tile_bytes(C, H, w_item)
                      + _padded_tile_bytes(1, H, b_item)
                      + _padded_tile_bytes(H, C, w_item)
                      + _padded_tile_bytes(1, C, b_item))

    vmem_cap = _physical_vmem_bytes()
    if vmem_budget_bytes is None:
        vmem_budget_bytes = int(0.6 * vmem_cap)     # ~76 MiB v5e/v6e, ~38 MiB v7x
    # Clamp the budget so Nb can never be sized past what the compiler gets.
    budget = max(16 << 20, min(int(vmem_budget_bytes), int(0.8 * vmem_cap)))

    if block_rows is None:
        nb = _choose_block_rows(N, row_bytes, row_vmem, budget, param_vmem,
                                target_block_bytes)
    else:
        nb = max(1, min(int(block_rows), N))
    grid = pl.cdiv(N, nb)

    # Derive the compiler VMEM limit from actual usage, never a fixed constant.
    usage = 4 * nb * row_vmem + param_vmem          # 2x in + 2x out buffers + params
    vmem_limit = int(min(max(usage + (8 << 20), 32 << 20), vmem_cap))

    cost = pl.CostEstimate(
        flops=2 * N * C * L + 4 * N * C * H + N * C * L,   # pool + MLP + scale
        transcendentals=N * C,                             # sigmoid
        bytes_accessed=2 * N * C * L * x_item + 2 * C * H * w_item + (C + H) * b_item,
    )

    return pl.pallas_call(
        se_block_kernel,
        out_shape=jax.ShapeDtypeStruct((N, C, L), x.dtype),
        grid_spec=pltpu.PrefetchScalarGridSpec(
            num_scalar_prefetch=0,
            grid=(grid,),
            in_specs=[
                pl.BlockSpec((nb, C, L), lambda n: (n, 0, 0)),   # x (streamed)
                pl.BlockSpec((C, H), lambda n: (0, 0)),          # w1 (resident)
                pl.BlockSpec((1, H), lambda n: (0, 0)),          # b1
                pl.BlockSpec((H, C), lambda n: (0, 0)),          # w2 (resident)
                pl.BlockSpec((1, C), lambda n: (0, 0)),          # b2
            ],
            out_specs=pl.BlockSpec((nb, C, L), lambda n: (n, 0, 0)),
        ),
        compiler_params=pltpu.CompilerParams(
            dimension_semantics=("parallel",),
            vmem_limit_bytes=vmem_limit,
        ),
        cost_estimate=cost,
    )(x, w1, b1, w2, b2)


def se_block_ref(x, w1, b1, w2, b2):
    """Pure-JAX reference mirroring the PyTorch forward (fp32)."""
    xf = x.astype(jnp.float32)
    x_sq = jnp.mean(xf, axis=-1)                                 # (N, C)
    h = jnp.maximum(x_sq @ w1 + jnp.reshape(b1, (1, -1)), 0.0)   # (N, H)
    s = jax.nn.sigmoid(h @ w2 + jnp.reshape(b2, (1, -1)))        # (N, C)
    return xf * s[:, :, None]


if __name__ == "__main__":
    # Small shapes consistent with the module (channels divisible by se_ratio).
    # L = 128 keeps the output store lane-dense.
    N, C, L = 8, 32, 128
    se_ratio = 4
    H = C // se_ratio

    key = jax.random.PRNGKey(0)
    kx, k1, k2, k3, k4 = jax.random.split(key, 5)

    x = jax.random.normal(kx, (N, C, L), dtype=jnp.float32)

    # nn.Linear(C, H) and nn.Linear(H, C) params, stored pre-transposed as
    # (in, out); biases kept 1-D like PyTorch (wrapper reshapes them).
    w1 = jax.random.normal(k1, (C, H), dtype=jnp.float32) * 0.1
    b1 = jax.random.normal(k2, (H,), dtype=jnp.float32) * 0.1
    w2 = jax.random.normal(k3, (H, C), dtype=jnp.float32) * 0.1
    b2 = jax.random.normal(k4, (C,), dtype=jnp.float32) * 0.1

    # --- fp32 path ---
    out = jax.block_until_ready(se_block(x, w1, b1, w2, b2))
    ref = se_block_ref(x, w1, b1, w2, b2)
    assert out.shape == (N, C, L)
    assert jnp.allclose(out, ref, atol=1e-5, rtol=1e-5), "fp32 mismatch vs reference"

    # --- bf16 I/O path (halves HBM traffic; mean/MLP still accumulate in fp32) ---
    x_bf16 = x.astype(jnp.bfloat16)
    out_bf16 = jax.block_until_ready(se_block(x_bf16, w1, b1, w2, b2))
    ref_bf16 = se_block_ref(x_bf16, w1, b1, w2, b2)
    assert out_bf16.dtype == jnp.bfloat16
    assert jnp.allclose(out_bf16.astype(jnp.float32), ref_bf16,
                        atol=5e-2, rtol=5e-2), "bf16 mismatch vs reference"

    # --- ragged-grid path: N not divisible by block_rows, L not a 128 multiple ---
    N2, L2 = 5, 96
    x2 = jax.random.normal(kx, (N2, C, L2), dtype=jnp.float32)
    out2 = jax.block_until_ready(se_block(x2, w1, b1, w2, b2, block_rows=2))
    ref2 = se_block_ref(x2, w1, b1, w2, b2)
    assert jnp.allclose(out2, ref2, atol=1e-5, rtol=1e-5), "ragged mismatch vs reference"

    print("KERNEL_OK")
</pallas_src>

<mosaic_0001>
module attributes {stable_mosaic.version = 11 : i64} {
  func.func @se_block_kernel(%arg0: i32, %arg1: memref<8x32x128xf32, #tpu.memory_space<vmem>>, %arg2: memref<32x8xf32, #tpu.memory_space<vmem>>, %arg3: memref<1x8xf32, #tpu.memory_space<vmem>>, %arg4: memref<8x32xf32, #tpu.memory_space<vmem>>, %arg5: memref<1x32xf32, #tpu.memory_space<vmem>>, %arg6: memref<8x32x128xf32, #tpu.memory_space<vmem>>) attributes {dimension_semantics = [#tpu.dimension_semantics<parallel>], iteration_bounds = array<i64: 1>, scalar_prefetch = 0 : i64, scratch_operands = 0 : i64, tpu.core_type = #tpu.core_type<tc>, window_params = [{transform_indices = @transform_0, window_bounds = array<i64: 8, 32, 128>}, {pipeline_mode = #tpu.pipeline_mode<synchronous>, transform_indices = @transform_1, window_bounds = array<i64: 32, 8>}, {pipeline_mode = #tpu.pipeline_mode<synchronous>, transform_indices = @transform_2, window_bounds = array<i64: 1, 8>}, {pipeline_mode = #tpu.pipeline_mode<synchronous>, transform_indices = @transform_3, window_bounds = array<i64: 8, 32>}, {pipeline_mode = #tpu.pipeline_mode<synchronous>, transform_indices = @transform_4, window_bounds = array<i64: 1, 32>}, {transform_indices = @transform_5, window_bounds = array<i64: 8, 32, 128>}]} {
    %c0 = arith.constant 0 : index
    %c0_0 = arith.constant 0 : index
    %c0_1 = arith.constant 0 : index
    %0 = vector.load %arg1[%c0, %c0_0, %c0_1] : memref<8x32x128xf32, #tpu.memory_space<vmem>>, vector<8x32x128xf32>
    %cst = arith.constant 1.000000e+00 : f32
    %1 = vector.broadcast %cst : f32 to vector<8x128x1xf32>
    "tpu.trace_start"() <{level = 10 : i32, message = "bcl,blo->bco"}> : () -> ()
    %cst_2 = arith.constant dense<0.000000e+00> : vector<8x32x1xf32>
    %2 = tpu.matmul %0, %1, %cst_2 {dimension_numbers = #tpu.dot_dimension_numbers<[2], [1], [1], [2], [0, 0, 0, 1, 1, 2], [0], [0]>} : vector<8x32x128xf32>, vector<8x128x1xf32>, vector<8x32x1xf32> -> vector<8x32x1xf32>
    "tpu.trace_stop"() : () -> ()
    %3 = vector.shape_cast %2 : vector<8x32x1xf32> to vector<8x32xf32>
    %cst_3 = arith.constant 7.812500e-03 : f32
    %4 = vector.broadcast %cst_3 : f32 to vector<8x32xf32>
    %5 = arith.mulf %3, %4 : vector<8x32xf32>
    %c0_4 = arith.constant 0 : index
    %c0_5 = arith.constant 0 : index
    %6 = vector.load %arg2[%c0_4, %c0_5] : memref<32x8xf32, #tpu.memory_space<vmem>>, vector<32x8xf32>
    %cst_6 = arith.constant dense<0.000000e+00> : vector<8x8xf32>
    %7 = tpu.matmul %5, %6, %cst_6 {dimension_numbers = #tpu.dot_dimension_numbers<[1], [0], [0], [1], [0, 0, 1, 1], [], []>} : vector<8x32xf32>, vector<32x8xf32>, vector<8x8xf32> -> vector<8x8xf32>
    %c0_7 = arith.constant 0 : index
    %c0_8 = arith.constant 0 : index
    %8 = vector.load %arg3[%c0_7, %c0_8] : memref<1x8xf32, #tpu.memory_space<vmem>>, vector<1x8xf32>
    %9 = vector.broadcast %8 : vector<1x8xf32> to vector<8x8xf32>
    %10 = arith.addf %7, %9 : vector<8x8xf32>
    %cst_9 = arith.constant 0.000000e+00 : f32
    %11 = vector.broadcast %cst_9 : f32 to vector<8x8xf32>
    %12 = arith.maximumf %10, %11 : vector<8x8xf32>
    %c0_10 = arith.constant 0 : index
    %c0_11 = arith.constant 0 : index
    %13 = vector.load %arg4[%c0_10, %c0_11] : memref<8x32xf32, #tpu.memory_space<vmem>>, vector<8x32xf32>
    %cst_12 = arith.constant dense<0.000000e+00> : vector<8x32xf32>
    %14 = tpu.matmul %12, %13, %cst_12 {dimension_numbers = #tpu.dot_dimension_numbers<[1], [0], [0], [1], [0, 0, 1, 1], [], []>} : vector<8x8xf32>, vector<8x32xf32>, vector<8x32xf32> -> vector<8x32xf32>
    %c0_13 = arith.constant 0 : index
    %c0_14 = arith.constant 0 : index
    %15 = vector.load %arg5[%c0_13, %c0_14] : memref<1x32xf32, #tpu.memory_space<vmem>>, vector<1x32xf32>
    %16 = vector.broadcast %15 : vector<1x32xf32> to vector<8x32xf32>
    %17 = arith.addf %14, %16 : vector<8x32xf32>
    %18 = arith.negf %17 : vector<8x32xf32>
    %19 = math.exp %18 : vector<8x32xf32>
    %cst_15 = arith.constant 1.000000e+00 : f32
    %20 = vector.broadcast %cst_15 : f32 to vector<8x32xf32>
    %21 = arith.addf %20, %19 : vector<8x32xf32>
    %22 = arith.divf %20, %21 : vector<8x32xf32>
    %23 = vector.shape_cast %22 : vector<8x32xf32> to vector<8x32x1xf32>
    %24 = vector.broadcast %23 : vector<8x32x1xf32> to vector<8x32x128xf32>
    %25 = arith.mulf %0, %24 : vector<8x32x128xf32>
    %c0_16 = arith.constant 0 : index
    %c0_17 = arith.constant 0 : index
    %c0_18 = arith.constant 0 : index
    %26 = vector.load %arg6[%c0_16, %c0_17, %c0_18] : memref<8x32x128xf32, #tpu.memory_space<vmem>>, vector<8x32x128xf32>
    tpu.vector_store %arg6[%c0_16, %c0_17, %c0_18], %25 {strides = array<i32>} : memref<8x32x128xf32, #tpu.memory_space<vmem>>, vector<8x32x128xf32>,
    return
  }
  func.func @transform_0(%arg0: i32) -> (i32, i32, i32) {
    %c0_i32 = arith.constant 0 : i32
    %c0_i32_0 = arith.constant 0 : i32
    %c0_i32_1 = arith.constant 0 : i32
    return %arg0, %c0_i32, %c0_i32_0 : i32, i32, i32
  }
  func.func @transform_1(%arg0: i32) -> (i32, i32) {
    %c0_i32 = arith.constant 0 : i32
    %c0_i32_0 = arith.constant 0 : i32
    %c0_i32_1 = arith.constant 0 : i32
    return %c0_i32, %c0_i32_0 : i32, i32
  }
  func.func @transform_2(%arg0: i32) -> (i32, i32) {
    %c0_i32 = arith.constant 0 : i32
    %c0_i32_0 = arith.constant 0 : i32
    %c0_i32_1 = arith.constant 0 : i32
    return %c0_i32, %c0_i32_0 : i32, i32
  }
  func.func @transform_3(%arg0: i32) -> (i32, i32) {
    %c0_i32 = arith.constant 0 : i32
    %c0_i32_0 = arith.constant 0 : i32
    %c0_i32_1 = arith.constant 0 : i32
    return %c0_i32, %c0_i32_0 : i32, i32
  }
  func.func @transform_4(%arg0: i32) -> (i32, i32) {
    %c0_i32 = arith.constant 0 : i32
    %c0_i32_0 = arith.constant 0 : i32
    %c0_i32_1 = arith.constant 0 : i32
    return %c0_i32, %c0_i32_0 : i32, i32
  }
  func.func @transform_5(%arg0: i32) -> (i32, i32, i32) {
    %c0_i32 = arith.constant 0 : i32
    %c0_i32_0 = arith.constant 0 : i32
    %c0_i32_1 = arith.constant 0 : i32
    return %arg0, %c0_i32, %c0_i32_0 : i32, i32, i32
  }
}

</mosaic_0001>

<llo_original>
// kernel: tpu_custom_call.1
$region0: #{tpu_custom_call.1}
  #allocation0 [shape = 'u32[]', space=smem, size = 0x4, offset = 0x4, fixed_abs, tag = 'smem constant byte address 0x4 - core index']
  #allocation1 [shape = 'u32[144,128]{1,0:T(1,128)}', space=vmem, size = 0x12000, scoped, tag = 'internal scratch']
  %s0 = inlined_call_operand.hbm [shape: f32[8,32,128], index: 0, kind: input, shape index: {}]
  %s1 = inlined_call_operand.vmem [shape: f32[32,8], index: 1, kind: input, shape index: {}]
  %s2 = inlined_call_operand.vmem [shape: f32[1,8], index: 2, kind: input, shape index: {}]
  %s3 = inlined_call_operand.vmem [shape: f32[8,32], index: 3, kind: input, shape index: {}]
  %s4 = inlined_call_operand.vmem [shape: f32[1,32], index: 4, kind: input, shape index: {}]
  %s5 = inlined_call_operand.hbm [shape: f32[8,32,128], index: 5, kind: output, shape index: {}]
  %s6 = sld [smem:[#allocation0]]
  $region34: #{tpu_custom_call.1} parent=0
    _
  %s8 = ssub.s32 1, %s6
  %s9 = scalar_select 0, %s8, %s6
  $region1: #{tpu_custom_call.1} parent=0
    #allocation2 [shape = 'u8[131072]{0}', space=vmem, size = 0x20000, scoped, tag = 'input window, operand 0, single buffered']
    #allocation3 [shape = 's32[1]{0}', space=sflag, size = 0x4, scoped, tag = 'scoped memory for tpu_custom_call.1']
    #allocation4 [shape = 's32[1]{0}', space=sflag, size = 0x4, scoped, tag = 'scoped memory for tpu_custom_call.1']
    #allocation5 [shape = 'u8[131072]{0}', space=vmem, size = 0x20000, scoped, tag = 'output window, operand 0, single buffered']
    %10 = vsyncpa [#allocation3], 0
    %11 = vsyncpa [#allocation4], 0
    // Predicated region
    $region2: #{tpu_custom_call.1} parent=1 // pred_check
      _
    $region3: #{tpu_custom_call.1} parent=1 // pred_check_branch
      %13 = sbr.rel (0) target = $region5
    $region4: #{tpu_custom_call.1} parent=1 // pred_region
      %s15 = ssub.s32 4096, 4096
      %16 = vsyncadd [#allocation3], %s15
      %s17 = sshll.u32 [#allocation2], 4
      %s18 = int_to_ptr.vmem [resolvable:$true] %s17
      %23 = dma.hbm_to_vmem [thread:$0]  %s0, 4096, %s18, [#allocation3], 128, 128, 8
    $region5: #{tpu_custom_call.1} parent=1 // pred_fallthru
      _
    // Predicated region
    $region6: #{tpu_custom_call.1} parent=1 // pred_check
      _
    $region7: #{tpu_custom_call.1} parent=1 // pred_check_branch
      %25 = sbr.rel (0) target = $region9
    $region8: #{tpu_custom_call.1} parent=1 // pred_region
      _
    $region9: #{tpu_custom_call.1} parent=1 // pred_fallthru
      _
    // Predicated region
    $region10: #{tpu_custom_call.1} parent=1 // pred_check
      _
    $region11: #{tpu_custom_call.1} parent=1 // pred_check_branch
      %27 = sbr.rel (0) target = $region13
    $region12: #{tpu_custom_call.1} parent=1 // pred_region
      _
    $region13: #{tpu_custom_call.1} parent=1 // pred_fallthru
      _
    // Predicated region
    $region14: #{tpu_custom_call.1} parent=1 // pred_check
      _
    $region15: #{tpu_custom_call.1} parent=1 // pred_check_branch
      %29 = sbr.rel (0) target = $region17
    $region16: #{tpu_custom_call.1} parent=1 // pred_region
      _
    $region17: #{tpu_custom_call.1} parent=1 // pred_fallthru
      _
    // Predicated region
    $region18: #{tpu_custom_call.1} parent=1 // pred_check
      _
    $region19: #{tpu_custom_call.1} parent=1 // pred_check_branch
      %31 = sbr.rel (0) target = $region21
    $region20: #{tpu_custom_call.1} parent=1 // pred_region
      _
    $region21: #{tpu_custom_call.1} parent=1 // pred_fallthru
      _
    // Predicated region
    $region22: #{tpu_custom_call.1} parent=1 // pred_check
      _
    $region23: #{tpu_custom_call.1} parent=1 // pred_check_branch
      %33 = sbr.rel (0) target = $region25
    $region24: #{tpu_custom_call.1} parent=1 // pred_region
      %34 = dma.done [#allocation3], 4096
    $region25: #{tpu_custom_call.1} parent=1 // pred_fallthru
      _
    %v35 = vld [vmem:[#allocation2] sm:$0xff]
    %v36 = vld [vmem:[#allocation2 + $0x8] sm:$0xff]
    %v37 = vld [vmem:[#allocation2 + $0x10] sm:$0xff]
    %v38 = vld [vmem:[#allocation2 + $0x18] sm:$0xff]
    %v39 = vld [vmem:[#allocation2 + $0x20] sm:$0xff]
    %v40 = vld [vmem:[#allocation2 + $0x28] sm:$0xff]
    %v41 = vld [vmem:[#allocation2 + $0x30] sm:$0xff]
    %v42 = vld [vmem:[#allocation2 + $0x38] sm:$0xff]
    %v43 = vld [vmem:[#allocation2 + $0x40] sm:$0xff]
    %v44 = vld [vmem:[#allocation2 + $0x48] sm:$0xff]
    %v45 = vld [vmem:[#allocation2 + $0x50] sm:$0xff]
    %v46 = vld [vmem:[#allocation2 + $0x58] sm:$0xff]
    %v47 = vld [vmem:[#allocation2 + $0x60] sm:$0xff]
    %v48 = vld [vmem:[#allocation2 + $0x68] sm:$0xff]
    %v49 = vld [vmem:[#allocation2 + $0x70] sm:$0xff]
    %v50 = vld [vmem:[#allocation2 + $0x78] sm:$0xff]
    %v51 = vld [vmem:[#allocation2 + $0x80] sm:$0xff]
    %v52 = vld [vmem:[#allocation2 + $0x88] sm:$0xff]
    %v53 = vld [vmem:[#allocation2 + $0x90] sm:$0xff]
    %v54 = vld [vmem:[#allocation2 + $0x98] sm:$0xff]
    %v55 = vld [vmem:[#allocation2 + $0xa0] sm:$0xff]
    %v56 = vld [vmem:[#allocation2 + $0xa8] sm:$0xff]
    %v57 = vld [vmem:[#allocation2 + $0xb0] sm:$0xff]
    %v58 = vld [vmem:[#allocation2 + $0xb8] sm:$0xff]
    %v59 = vld [vmem:[#allocation2 + $0xc0] sm:$0xff]
    %v60 = vld [vmem:[#allocation2 + $0xc8] sm:$0xff]
    %v61 = vld [vmem:[#allocation2 + $0xd0] sm:$0xff]
    %v62 = vld [vmem:[#allocation2 + $0xd8] sm:$0xff]
    %v63 = vld [vmem:[#allocation2 + $0xe0] sm:$0xff]
    %v64 = vld [vmem:[#allocation2 + $0xe8] sm:$0xff]
    %v65 = vld [vmem:[#allocation2 + $0xf0] sm:$0xff]
    %v66 = vld [vmem:[#allocation2 + $0xf8] sm:$0xff]
    %67 = vmatprep.subr.mxu0 0.0
    %68 = vmatpush1.msra.mxu0 1.0
    %69 = vmatprep.subr.mxu0 0.0
    %70 = vmatpush1.msra.mxu0 1.0
    %71 = vmatprep.subr.mxu0 0.0
    %72 = vmatpush1.msra.mxu0 1.0
    %73 = vmatprep.subr.mxu0 0.0
    %74 = vmatpush1.msra.mxu0 1.0
    %75 = vmatprep.subr.mxu0 0.0
    %76 = vmatpush1.msra.mxu0 1.0
    %77 = vmatprep.subr.mxu0 0.0
    %78 = vmatpush1.msra.mxu0 1.0
    %79 = vmatprep.subr.mxu0 0.0
    %80 = vmatpush1.msra.mxu0 1.0
    %81 = vmatprep.subr.mxu0 0.0
    %82 = vmatpush1.msra.mxu0 1.0
    %83 = vmatprep.subr.mxu0 0.0
    %84 = vmatpush1.msra.mxu0 1.0
    %85 = vmatprep.subr.mxu0 0.0
    %86 = vmatpush1.msra.mxu0 1.0
    %87 = vmatprep.subr.mxu0 0.0
    %88 = vmatpush1.msra.mxu0 1.0
    %89 = vmatprep.subr.mxu0 0.0
    %90 = vmatpush1.msra.mxu0 1.0
    %91 = vmatprep.subr.mxu0 0.0
    %92 = vmatpush1.msra.mxu0 1.0
    %93 = vmatprep.subr.mxu0 0.0
    %94 = vmatpush1.msra.mxu0 1.0
    %95 = vmatprep.subr.mxu0 0.0
    %96 = vmatpush1.msra.mxu0 1.0
    %97 = vmatprep.subr.mxu0 0.0
    %98 = vmatpush1.msra.mxu0 1.0
    %99 = vmatprep.subr.mxu0 0.0
    %100 = vmatpush1.msra.mxu0 0.0
    %101 = vmatprep.subr.mxu0 0.0
    %102 = vmatpush1.msra.mxu0 0.0
    %103 = vmatprep.subr.mxu0 0.0
    %104 = vmatpush1.msra.mxu0 0.0
    %105 = vmatprep.subr.mxu0 0.0
    %106 = vmatpush1.msra.mxu0 0.0
    %107 = vmatprep.subr.mxu0 0.0
    %108 = vmatpush1.msra.mxu0 0.0
    %109 = vmatprep.subr.mxu0 0.0
    %110 = vmatpush1.msra.mxu0 0.0
    %111 = vmatprep.subr.mxu0 0.0
    %112 = vmatpush1.msra.mxu0 0.0
    %113 = vmatprep.subr.mxu0 0.0
    %114 = vmatpush1.msra.mxu0 0.0
    %115 = vmatprep.subr.mxu0 0.0
    %116 = vmatpush1.msra.mxu0 0.0
    %117 = vmatprep.subr.mxu0 0.0
    %118 = vmatpush1.msra.mxu0 0.0
    %119 = vmatprep.subr.mxu0 0.0
    %120 = vmatpush1.msra.mxu0 0.0
    %121 = vmatprep.subr.mxu0 0.0
    %122 = vmatpush1.msra.mxu0 0.0
    %123 = vmatprep.subr.mxu0 0.0
    %124 = vmatpush1.msra.mxu0 0.0
    %125 = vmatprep.subr.mxu0 0.0
    %126 = vmatpush1.msra.mxu0 0.0
    %127 = vmatprep.subr.mxu0 0.0
    %128 = vmatpush1.msra.mxu0 0.0
    %129 = vmatprep.subr.mxu0 0.0
    %130 = vmatpush1.msra.mxu0 0.0
    %131 = vmatprep.mubr.f32.mxu0 0.0
    %132 = vmatmul.mubr.f32.gmra.mrb[0].mxu0 %v35
    %v133 = vpop.f32.mrb[0].mxu0
    %v134 = vadd.f32 0.0, %v133
    %v135 = vpop.f32.mrb[0].mxu0
    %136 = vmatprep.mubr.f32.mxu0 0.0
    %137 = vmatmul.mubr.f32.gmra.mrb[0].mxu0 %v36
    %v138 = vpop.f32.mrb[0].mxu0
    %v139 = vadd.f32 0.0, %v138
    %v140 = vpop.f32.mrb[0].mxu0
    %141 = vmatprep.mubr.f32.mxu0 0.0
    %142 = vmatmul.mubr.f32.gmra.mrb[0].mxu0 %v37
    %v143 = vpop.f32.mrb[0].mxu0
    %v144 = vadd.f32 0.0, %v143
    %v145 = vpop.f32.mrb[0].mxu0
    %146 = vmatprep.mubr.f32.mxu0 0.0
    %147 = vmatmul.mubr.f32.gmra.mrb[0].mxu0 %v38
    %v148 = vpop.f32.mrb[0].mxu0
    %v149 = vadd.f32 0.0, %v148
    %v150 = vpop.f32.mrb[0].mxu0
    %151 = vdwg.mxu0
    %152 = vmatprep.subr.mxu0 0.0
    %153 = vmatpush1.msra.mxu0 1.0
    %154 = vmatprep.subr.mxu0 0.0
    %155 = vmatpush1.msra.mxu0 1.0
    %156 = vmatprep.subr.mxu0 0.0
    %157 = vmatpush1.msra.mxu0 1.0
    %158 = vmatprep.subr.mxu0 0.0
    %159 = vmatpush1.msra.mxu0 1.0
    %160 = vmatprep.subr.mxu0 0.0
    %161 = vmatpush1.msra.mxu0 1.0
    %162 = vmatprep.subr.mxu0 0.0
    %163 = vmatpush1.msra.mxu0 1.0
    %164 = vmatprep.subr.mxu0 0.0
    %165 = vmatpush1.msra.mxu0 1.0
    %166 = vmatprep.subr.mxu0 0.0
    %167 = vmatpush1.msra.mxu0 1.0
    %168 = vmatprep.subr.mxu0 0.0
    %169 = vmatpush1.msra.mxu0 1.0
    %170 = vmatprep.subr.mxu0 0.0
    %171 = vmatpush1.msra.mxu0 1.0
    %172 = vmatprep.subr.mxu0 0.0
    %173 = vmatpush1.msra.mxu0 1.0
    %174 = vmatprep.subr.mxu0 0.0
    %175 = vmatpush1.msra.mxu0 1.0
    %176 = vmatprep.subr.mxu0 0.0
    %177 = vmatpush1.msra.mxu0 1.0
    %178 = vmatprep.subr.mxu0 0.0
    %179 = vmatpush1.msra.mxu0 1.0
    %180 = vmatprep.subr.mxu0 0.0
    %181 = vmatpush1.msra.mxu0 1.0
    %182 = vmatprep.subr.mxu0 0.0
    %183 = vmatpush1.msra.mxu0 1.0
    %184 = vmatprep.subr.mxu0 0.0
    %185 = vmatpush1.msra.mxu0 0.0
    %186 = vmatprep.subr.mxu0 0.0
    %187 = vmatpush1.msra.mxu0 0.0
    %188 = vmatprep.subr.mxu0 0.0
    %189 = vmatpush1.msra.mxu0 0.0
    %190 = vmatprep.subr.mxu0 0.0
    %191 = vmatpush1.msra.mxu0 0.0
    %192 = vmatprep.subr.mxu0 0.0
    %193 = vmatpush1.msra.mxu0 0.0
    %194 = vmatprep.subr.mxu0 0.0
    %195 = vmatpush1.msra.mxu0 0.0
    %196 = vmatprep.subr.mxu0 0.0
    %197 = vmatpush1.msra.mxu0 0.0
    %198 = vmatprep.subr.mxu0 0.0
    %199 = vmatpush1.msra.mxu0 0.0
    %200 = vmatprep.subr.mxu0 0.0
    %201 = vmatpush1.msra.mxu0 0.0
    %202 = vmatprep.subr.mxu0 0.0
    %203 = vmatpush1.msra.mxu0 0.0
    %204 = vmatprep.subr.mxu0 0.0
    %205 = vmatpush1.msra.mxu0 0.0
    %206 = vmatprep.subr.mxu0 0.0
    %207 = vmatpush1.msra.mxu0 0.0
    %208 = vmatprep.subr.mxu0 0.0
    %209 = vmatpush1.msra.mxu0 0.0
    %210 = vmatprep.subr.mxu0 0.0
    %211 = vmatpush1.msra.mxu0 0.0
    %212 = vmatprep.subr.mxu0 0.0
    %213 = vmatpush1.msra.mxu0 0.0
    %214 = vmatprep.subr.mxu0 0.0
    %215 = vmatpush1.msra.mxu0 0.0
    %216 = vmatprep.mubr.f32.mxu0 0.0
    %217 = vmatmul.mubr.f32.gmra.mrb[0].mxu0 %v39
    %v218 = vpop.f32.mrb[0].mxu0
    %v219 = vadd.f32 0.0, %v218
    %v220 = vpop.f32.mrb[0].mxu0
    %221 = vmatprep.mubr.f32.mxu0 0.0
    %222 = vmatmul.mubr.f32.gmra.mrb[0].mxu0 %v40
    %v223 = vpop.f32.mrb[0].mxu0
    %v224 = vadd.f32 0.0, %v223
    %v225 = vpop.f32.mrb[0].mxu0
    %226 = vmatprep.mubr.f32.mxu0 0.0
    %227 = vmatmul.mubr.f32.gmra.mrb[0].mxu0 %v41
    %v228 = vpop.f32.mrb[0].mxu0
    %v229 = vadd.f32 0.0, %v228
    %v230 = vpop.f32.mrb[0].mxu0
    %231 = vmatprep.mubr.f32.mxu0 0.0
    %232 = vmatmul.mubr.f32.gmra.mrb[0].mxu0 %v42
    %v233 = vpop.f32.mrb[0].mxu0
    %v234 = vadd.f32 0.0, %v233
    %v235 = vpop.f32.mrb[0].mxu0
    %236 = vdwg.mxu0
    %237 = vmatprep.subr.mxu0 0.0
    %238 = vmatpush1.msra.mxu0 1.0
    %239 = vmatprep.subr.mxu0 0.0
    %240 = vmatpush1.msra.mxu0 1.0
    %241 = vmatprep.subr.mxu0 0.0
    %242 = vmatpush1.msra.mxu0 1.0
    %243 = vmatprep.subr.mxu0 0.0
    %244 = vmatpush1.msra.mxu0 1.0
    %245 = vmatprep.subr.mxu0 0.0
    %246 = vmatpush1.msra.mxu0 1.0
    %247 = vmatprep.subr.mxu0 0.0
    %248 = vmatpush1.msra.mxu0 1.0
    %249 = vmatprep.subr.mxu0 0.0
    %250 = vmatpush1.msra.mxu0 1.0
    %251 = vmatprep.subr.mxu0 0.0
    %252 = vmatpush1.msra.mxu0 1.0
    %253 = vmatprep.subr.mxu0 0.0
    %254 = vmatpush1.msra.mxu0 1.0
    %255 = vmatprep.subr.mxu0 0.0
    %256 = vmatpush1.msra.mxu0 1.0
    %257 = vmatprep.subr.mxu0 0.0
    %258 = vmatpush1.msra.mxu0 1.0
    %259 = vmatprep.subr.mxu0 0.0
    %260 = vmatpush1.msra.mxu0 1.0
    %261 = vmatprep.subr.mxu0 0.0
    %262 = vmatpush1.msra.mxu0 1.0
    %263 = vmatprep.subr.mxu0 0.0
    %264 = vmatpush1.msra.mxu0 1.0
    %265 = vmatprep.subr.mxu0 0.0
    %266 = vmatpush1.msra.mxu0 1.0
    %267 = vmatprep.subr.mxu0 0.0
    %268 = vmatpush1.msra.mxu0 1.0
    %269 = vmatprep.subr.mxu0 0.0
    %270 = vmatpush1.msra.mxu0 0.0
    %271 = vmatprep.subr.mxu0 0.0
    %272 = vmatpush1.msra.mxu0 0.0
    %273 = vmatprep.subr.mxu0 0.0
    %274 = vmatpush1.msra.mxu0 0.0
    %275 = vmatprep.subr.mxu0 0.0
    %276 = vmatpush1.msra.mxu0 0.0
    %277 = vmatprep.subr.mxu0 0.0
    %278 = vmatpush1.msra.mxu0 0.0
    %279 = vmatprep.subr.mxu0 0.0
    %280 = vmatpush1.msra.mxu0 0.0
    %281 = vmatprep.subr.mxu0 0.0
    %282 = vmatpush1.msra.mxu0 0.0
    %283 = vmatprep.subr.mxu0 0.0
    %284 = vmatpush1.msra.mxu0 0.0
    %285 = vmatprep.subr.mxu0 0.0
    %286 = vmatpush1.msra.mxu0 0.0
    %287 = vmatprep.subr.mxu0 0.0
    %288 = vmatpush1.msra.mxu0 0.0
    %289 = vmatprep.subr.mxu0 0.0
    %290 = vmatpush1.msra.mxu0 0.0
    %291 = vmatprep.subr.mxu0 0.0
    %292 = vmatpush1.msra.mxu0 0.0
    %293 = vmatprep.subr.mxu0 0.0
    %294 = vmatpush1.msra.mxu0 0.0
    %295 = vmatprep.subr.mxu0 0.0
    %296 = vmatpush1.msra.mxu0 0.0
    %297 = vmatprep.subr.mxu0 0.0
    %298 = vmatpush1.msra.mxu0 0.0
    %299 = vmatprep.subr.mxu0 0.0
    %300 = vmatpush1.msra.mxu0 0.0
    %301 = vmatprep.mubr.f32.mxu0 0.0
    %302 = vmatmul.mubr.f32.gmra.mrb[0].mxu0 %v43
    %v303 = vpop.f32.mrb[0].mxu0
    %v304 = vadd.f32 0.0, %v303
    %v305 = vpop.f32.mrb[0].mxu0
    %306 = vmatprep.mubr.f32.mxu0 0.0
    %307 = vmatmul.mubr.f32.gmra.mrb[0].mxu0 %v44
    %v308 = vpop.f32.mrb[0].mxu0
    %v309 = vadd.f32 0.0, %v308
    %v310 = vpop.f32.mrb[0].mxu0
    %311 = vmatprep.mubr.f32.mxu0 0.0
    %312 = vmatmul.mubr.f32.gmra.mrb[0].mxu0 %v45
    %v313 = vpop.f32.mrb[0].mxu0
    %v314 = vadd.f32 0.0, %v313
    %v315 = vpop.f32.mrb[0].mxu0
    %316 = vmatprep.mubr.f32.mxu0 0.0
    %317 = vmatmul.mubr.f32.gmra.mrb[0].mxu0 %v46
    %v318 = vpop.f32.mrb[0].mxu0
    %v319 = vadd.f32 0.0, %v318
    %v320 = vpop.f32.mrb[0].mxu0
    %321 = vdwg.mxu0
    %322 = vmatprep.subr.mxu0 0.0
    %323 = vmatpush1.msra.mxu0 1.0
    %324 = vmatprep.subr.mxu0 0.0
    %325 = vmatpush1.msra.mxu0 1.0
    %326 = vmatprep.subr.mxu0 0.0
    %327 = vmatpush1.msra.mxu0 1.0
    %328 = vmatprep.subr.mxu0 0.0
    %329 = vmatpush1.msra.mxu0 1.0
    %330 = vmatprep.subr.mxu0 0.0
    %331 = vmatpush1.msra.mxu0 1.0
    %332 = vmatprep.subr.mxu0 0.0
    %333 = vmatpush1.msra.mxu0 1.0
    %334 = vmatprep.subr.mxu0 0.0
    %335 = vmatpush1.msra.mxu0 1.0
    %336 = vmatprep.subr.mxu0 0.0
    %337 = vmatpush1.msra.mxu0 1.0
    %338 = vmatprep.subr.mxu0 0.0
    %339 = vmatpush1.msra.mxu0 1.0
    %340 = vmatprep.subr.mxu0 0.0
    %341 = vmatpush1.msra.mxu0 1.0
    %342 = vmatprep.subr.mxu0 0.0
    %343 = vmatpush1.msra.mxu0 1.0
    %344 = vmatprep.subr.mxu0 0.0
    %345 = vmatpush1.msra.mxu0 1.0
    %346 = vmatprep.subr.mxu0 0.0
    %347 = vmatpush1.msra.mxu0 1.0
    %348 = vmatprep.subr.mxu0 0.0
    %349 = vmatpush1.msra.mxu0 1.0
    %350 = vmatprep.subr.mxu0 0.0
    %351 = vmatpush1.msra.mxu0 1.0
    %352 = vmatprep.subr.mxu0 0.0
    %353 = vmatpush1.msra.mxu0 1.0
    %354 = vmatprep.subr.mxu0 0.0
    %355 = vmatpush1.msra.mxu0 0.0
    %356 = vmatprep.subr.mxu0 0.0
    %357 = vmatpush1.msra.mxu0 0.0
    %358 = vmatprep.subr.mxu0 0.0
    %359 = vmatpush1.msra.mxu0 0.0
    %360 = vmatprep.subr.mxu0 0.0
    %361 = vmatpush1.msra.mxu0 0.0
    %362 = vmatprep.subr.mxu0 0.0
    %363 = vmatpush1.msra.mxu0 0.0
    %364 = vmatprep.subr.mxu0 0.0
    %365 = vmatpush1.msra.mxu0 0.0
    %366 = vmatprep.subr.mxu0 0.0
    %367 = vmatpush1.msra.mxu0 0.0
    %368 = vmatprep.subr.mxu0 0.0
    %369 = vmatpush1.msra.mxu0 0.0
    %370 = vmatprep.subr.mxu0 0.0
    %371 = vmatpush1.msra.mxu0 0.0
    %372 = vmatprep.subr.mxu0 0.0
    %373 = vmatpush1.msra.mxu0 0.0
    %374 = vmatprep.subr.mxu0 0.0
    %375 = vmatpush1.msra.mxu0 0.0
    %376 = vmatprep.subr.mxu0 0.0
    %377 = vmatpush1.msra.mxu0 0.0
    %378 = vmatprep.subr.mxu0 0.0
    %379 = vmatpush1.msra.mxu0 0.0
    %380 = vmatprep.subr.mxu0 0.0
    %381 = vmatpush1.msra.mxu0 0.0
    %382 = vmatprep.subr.mxu0 0.0
    %383 = vmatpush1.msra.mxu0 0.0
    %384 = vmatprep.subr.mxu0 0.0
    %385 = vmatpush1.msra.mxu0 0.0
    %386 = vmatprep.mubr.f32.mxu0 0.0
    %387 = vmatmul.mubr.f32.gmra.mrb[0].mxu0 %v47
    %v388 = vpop.f32.mrb[0].mxu0
    %v389 = vadd.f32 0.0, %v388
    %v390 = vpop.f32.mrb[0].mxu0
    %391 = vmatprep.mubr.f32.mxu0 0.0
    %392 = vmatmul.mubr.f32.gmra.mrb[0].mxu0 %v48
    %v393 = vpop.f32.mrb[0].mxu0
    %v394 = vadd.f32 0.0, %v393
    %v395 = vpop.f32.mrb[0].mxu0
    %396 = vmatprep.mubr.f32.mxu0 0.0
    %397 = vmatmul.mubr.f32.gmra.mrb[0].mxu0 %v49
    %v398 = vpop.f32.mrb[0].mxu0
    %v399 = vadd.f32 0.0, %v398
    %v400 = vpop.f32.mrb[0].mxu0
    %401 = vmatprep.mubr.f32.mxu0 0.0
    %402 = vmatmul.mubr.f32.gmra.mrb[0].mxu0 %v50
    %v403 = vpop.f32.mrb[0].mxu0
    %v404 = vadd.f32 0.0, %v403
    %v405 = vpop.f32.mrb[0].mxu0
    %406 = vdwg.mxu0
    %407 = vmatprep.subr.mxu0 0.0
    %408 = vmatpush1.msra.mxu0 1.0
    %409 = vmatprep.subr.mxu0 0.0
    %410 = vmatpush1.msra.mxu0 1.0
    %411 = vmatprep.subr.mxu0 0.0
    %412 = vmatpush1.msra.mxu0 1.0
    %413 = vmatprep.subr.mxu0 0.0
    %414 = vmatpush1.msra.mxu0 1.0
    %415 = vmatprep.subr.mxu0 0.0
    %416 = vmatpush1.msra.mxu0 1.0
    %417 = vmatprep.subr.mxu0 0.0
    %418 = vmatpush1.msra.mxu0 1.0
    %419 = vmatprep.subr.mxu0 0.0
    %420 = vmatpush1.msra.mxu0 1.0
    %421 = vmatprep.subr.mxu0 0.0
    %422 = vmatpush1.msra.mxu0 1.0
    %423 = vmatprep.subr.mxu0 0.0
    %424 = vmatpush1.msra.mxu0 1.0
    %425 = vmatprep.subr.mxu0 0.0
    %426 = vmatpush1.msra.mxu0 1.0
    %427 = vmatprep.subr.mxu0 0.0
    %428 = vmatpush1.msra.mxu0 1.0
    %429 = vmatprep.subr.mxu0 0.0
    %430 = vmatpush1.msra.mxu0 1.0
    %431 = vmatprep.subr.mxu0 0.0
    %432 = vmatpush1.msra.mxu0 1.0
    %433 = vmatprep.subr.mxu0 0.0
    %434 = vmatpush1.msra.mxu0 1.0
    %435 = vmatprep.subr.mxu0 0.0
    %436 = vmatpush1.msra.mxu0 1.0
    %437 = vmatprep.subr.mxu0 0.0
    %438 = vmatpush1.msra.mxu0 1.0
    %439 = vmatprep.subr.mxu0 0.0
    %440 = vmatpush1.msra.mxu0 0.0
    %441 = vmatprep.subr.mxu0 0.0
    %442 = vmatpush1.msra.mxu0 0.0
    %443 = vmatprep.subr.mxu0 0.0
    %444 = vmatpush1.msra.mxu0 0.0
    %445 = vmatprep.subr.mxu0 0.0
    %446 = vmatpush1.msra.mxu0 0.0
    %447 = vmatprep.subr.mxu0 0.0
    %448 = vmatpush1.msra.mxu0 0.0
    %449 = vmatprep.subr.mxu0 0.0
    %450 = vmatpush1.msra.mxu0 0.0
    %451 = vmatprep.subr.mxu0 0.0
    %452 = vmatpush1.msra.mxu0 0.0
    %453 = vmatprep.subr.mxu0 0.0
    %454 = vmatpush1.msra.mxu0 0.0
    %455 = vmatprep.subr.mxu0 0.0
    %456 = vmatpush1.msra.mxu0 0.0
    %457 = vmatprep.subr.mxu0 0.0
    %458 = vmatpush1.msra.mxu0 0.0
    %459 = vmatprep.subr.mxu0 0.0
    %460 = vmatpush1.msra.mxu0 0.0
    %461 = vmatprep.subr.mxu0 0.0
    %462 = vmatpush1.msra.mxu0 0.0
    %463 = vmatprep.subr.mxu0 0.0
    %464 = vmatpush1.msra.mxu0 0.0
    %465 = vmatprep.subr.mxu0 0.0
    %466 = vmatpush1.msra.mxu0 0.0
    %467 = vmatprep.subr.mxu0 0.0
    %468 = vmatpush1.msra.mxu0 0.0
    %469 = vmatprep.subr.mxu0 0.0
    %470 = vmatpush1.msra.mxu0 0.0
    %471 = vmatprep.mubr.f32.mxu0 0.0
    %472 = vmatmul.mubr.f32.gmra.mrb[0].mxu0 %v51
    %v473 = vpop.f32.mrb[0].mxu0
    %v474 = vadd.f32 0.0, %v473
    %v475 = vpop.f32.mrb[0].mxu0
    %476 = vmatprep.mubr.f32.mxu0 0.0
    %477 = vmatmul.mubr.f32.gmra.mrb[0].mxu0 %v52
    %v478 = vpop.f32.mrb[0].mxu0
    %v479 = vadd.f32 0.0, %v478
    %v480 = vpop.f32.mrb[0].mxu0
    %481 = vmatprep.mubr.f32.mxu0 0.0
    %482 = vmatmul.mubr.f32.gmra.mrb[0].mxu0 %v53
    %v483 = vpop.f32.mrb[0].mxu0
    %v484 = vadd.f32 0.0, %v483
    %v485 = vpop.f32.mrb[0].mxu0
    %486 = vmatprep.mubr.f32.mxu0 0.0
    %487 = vmatmul.mubr.f32.gmra.mrb[0].mxu0 %v54
    %v488 = vpop.f32.mrb[0].mxu0
    %v489 = vadd.f32 0.0, %v488
    %v490 = vpop.f32.mrb[0].mxu0
    %491 = vdwg.mxu0
    %492 = vmatprep.subr.mxu0 0.0
    %493 = vmatpush1.msra.mxu0 1.0
    %494 = vmatprep.subr.mxu0 0.0
    %495 = vmatpush1.msra.mxu0 1.0
    %496 = vmatprep.subr.mxu0 0.0
    %497 = vmatpush1.msra.mxu0 1.0
    %498 = vmatprep.subr.mxu0 0.0
    %499 = vmatpush1.msra.mxu0 1.0
    %500 = vmatprep.subr.mxu0 0.0
    %501 = vmatpush1.msra.mxu0 1.0
    %502 = vmatprep.subr.mxu0 0.0
    %503 = vmatpush1.msra.mxu0 1.0
    %504 = vmatprep.subr.mxu0 0.0
    %505 = vmatpush1.msra.mxu0 1.0
    %506 = vmatprep.subr.mxu0 0.0
    %507 = vmatpush1.msra.mxu0 1.0
    %508 = vmatprep.subr.mxu0 0.0
    %509 = vmatpush1.msra.mxu0 1.0
    %510 = vmatprep.subr.mxu0 0.0
    %511 = vmatpush1.msra.mxu0 1.0
    %512 = vmatprep.subr.mxu0 0.0
    %513 = vmatpush1.msra.mxu0 1.0
    %514 = vmatprep.subr.mxu0 0.0
    %515 = vmatpush1.msra.mxu0 1.0
    %516 = vmatprep.subr.mxu0 0.0
    %517 = vmatpush1.msra.mxu0 1.0
    %518 = vmatprep.subr.mxu0 0.0
    %519 = vmatpush1.msra.mxu0 1.0
    %520 = vmatprep.subr.mxu0 0.0
    %521 = vmatpush1.msra.mxu0 1.0
    %522 = vmatprep.subr.mxu0 0.0
    %523 = vmatpush1.msra.mxu0 1.0
    %524 = vmatprep.subr.mxu0 0.0
    %525 = vmatpush1.msra.mxu0 0.0
    %526 = vmatprep.subr.mxu0 0.0
    %527 = vmatpush1.msra.mxu0 0.0
    %528 = vmatprep.subr.mxu0 0.0
    %529 = vmatpush1.msra.mxu0 0.0
    %530 = vmatprep.subr.mxu0 0.0
    %531 = vmatpush1.msra.mxu0 0.0
    %532 = vmatprep.subr.mxu0 0.0
    %533 = vmatpush1.msra.mxu0 0.0
    %534 = vmatprep.subr.mxu0 0.0
    %535 = vmatpush1.msra.mxu0 0.0
    %536 = vmatprep.subr.mxu0 0.0
    %537 = vmatpush1.msra.mxu0 0.0
    %538 = vmatprep.subr.mxu0 0.0
    %539 = vmatpush1.msra.mxu0 0.0
    %540 = vmatprep.subr.mxu0 0.0
    %541 = vmatpush1.msra.mxu0 0.0
    %542 = vmatprep.subr.mxu0 0.0
    %543 = vmatpush1.msra.mxu0 0.0
    %544 = vmatprep.subr.mxu0 0.0
    %545 = vmatpush1.msra.mxu0 0.0
    %546 = vmatprep.subr.mxu0 0.0
    %547 = vmatpush1.msra.mxu0 0.0
    %548 = vmatprep.subr.mxu0 0.0
    %549 = vmatpush1.msra.mxu0 0.0
    %550 = vmatprep.subr.mxu0 0.0
    %551 = vmatpush1.msra.mxu0 0.0
    %552 = vmatprep.subr.mxu0 0.0
    %553 = vmatpush1.msra.mxu0 0.0
    %554 = vmatprep.subr.mxu0 0.0
    %555 = vmatpush1.msra.mxu0 0.0
    %556 = vmatprep.mubr.f32.mxu0 0.0
    %557 = vmatmul.mubr.f32.gmra.mrb[0].mxu0 %v55
    %v558 = vpop.f32.mrb[0].mxu0
    %v559 = vadd.f32 0.0, %v558
    %v560 = vpop.f32.mrb[0].mxu0
    %561 = vmatprep.mubr.f32.mxu0 0.0
    %562 = vmatmul.mubr.f32.gmra.mrb[0].mxu0 %v56
    %v563 = vpop.f32.mrb[0].mxu0
    %v564 = vadd.f32 0.0, %v563
    %v565 = vpop.f32.mrb[0].mxu0
    %566 = vmatprep.mubr.f32.mxu0 0.0
    %567 = vmatmul.mubr.f32.gmra.mrb[0].mxu0 %v57
    %v568 = vpop.f32.mrb[0].mxu0
    %v569 = vadd.f32 0.0, %v568
    %v570 = vpop.f32.mrb[0].mxu0
    %571 = vmatprep.mubr.f32.mxu0 0.0
    %572 = vmatmul.mubr.f32.gmra.mrb[0].mxu0 %v58
    %v573 = vpop.f32.mrb[0].mxu0
    %v574 = vadd.f32 0.0, %v573
    %v575 = vpop.f32.mrb[0].mxu0
    %576 = vdwg.mxu0
    %577 = vmatprep.subr.mxu0 0.0
    %578 = vmatpush1.msra.mxu0 1.0
    %579 = vmatprep.subr.mxu0 0.0
    %580 = vmatpush1.msra.mxu0 1.0
    %581 = vmatprep.subr.mxu0 0.0
    %582 = vmatpush1.msra.mxu0 1.0
    %583 = vmatprep.subr.mxu0 0.0
    %584 = vmatpush1.msra.mxu0 1.0
    %585 = vmatprep.subr.mxu0 0.0
    %586 = vmatpush1.msra.mxu0 1.0
    %587 = vmatprep.subr.mxu0 0.0
    %588 = vmatpush1.msra.mxu0 1.0
    %589 = vmatprep.subr.mxu0 0.0
    %590 = vmatpush1.msra.mxu0 1.0
    %591 = vmatprep.subr.mxu0 0.0
    %592 = vmatpush1.msra.mxu0 1.0
    %593 = vmatprep.subr.mxu0 0.0
    %594 = vmatpush1.msra.mxu0 1.0
    %595 = vmatprep.subr.mxu0 0.0
    %596 = vmatpush1.msra.mxu0 1.0
    %597 = vmatprep.subr.mxu0 0.0
    %598 = vmatpush1.msra.mxu0 1.0
    %599 = vmatprep.subr.mxu0 0.0
    %600 = vmatpush1.msra.mxu0 1.0
    %601 = vmatprep.subr.mxu0 0.0
    %602 = vmatpush1.msra.mxu0 1.0
    %603 = vmatprep.subr.mxu0 0.0
    %604 = vmatpush1.msra.mxu0 1.0
    %605 = vmatprep.subr.mxu0 0.0
    %606 = vmatpush1.msra.mxu0 1.0
    %607 = vmatprep.subr.mxu0 0.0
    %608 = vmatpush1.msra.mxu0 1.0
    %609 = vmatprep.subr.mxu0 0.0
    %610 = vmatpush1.msra.mxu0 0.0
    %611 = vmatprep.subr.mxu0 0.0
    %612 = vmatpush1.msra.mxu0 0.0
    %613 = vmatprep.subr.mxu0 0.0
    %614 = vmatpush1.msra.mxu0 0.0
    %615 = vmatprep.subr.mxu0 0.0
    %616 = vmatpush1.msra.mxu0 0.0
    %617 = vmatprep.subr.mxu0 0.0
    %618 = vmatpush1.msra.mxu0 0.0
    %619 = vmatprep.subr.mxu0 0.0
    %620 = vmatpush1.msra.mxu0 0.0
    %621 = vmatprep.subr.mxu0 0.0
    %622 = vmatpush1.msra.mxu0 0.0
    %623 = vmatprep.subr.mxu0 0.0
    %624 = vmatpush1.msra.mxu0 0.0
    %625 = vmatprep.subr.mxu0 0.0
    %626 = vmatpush1.msra.mxu0 0.0
    %627 = vmatprep.subr.mxu0 0.0
    %628 = vmatpush1.msra.mxu0 0.0
    %629 = vmatprep.subr.mxu0 0.0
    %630 = vmatpush1.msra.mxu0 0.0
    %631 = vmatprep.subr.mxu0 0.0
    %632 = vmatpush1.msra.mxu0 0.0
    %633 = vmatprep.subr.mxu0 0.0
    %634 = vmatpush1.msra.mxu0 0.0
    %635 = vmatprep.subr.mxu0 0.0
    %636 = vmatpush1.msra.mxu0 0.0
    %637 = vmatprep.subr.mxu0 0.0
    %638 = vmatpush1.msra.mxu0 0.0
    %639 = vmatprep.subr.mxu0 0.0
    %640 = vmatpush1.msra.mxu0 0.0
    %641 = vmatprep.mubr.f32.mxu0 0.0
    %642 = vmatmul.mubr.f32.gmra.mrb[0].mxu0 %v59
    %v643 = vpop.f32.mrb[0].mxu0
    %v644 = vadd.f32 0.0, %v643
    %v645 = vpop.f32.mrb[0].mxu0
    %646 = vmatprep.mubr.f32.mxu0 0.0
    %647 = vmatmul.mubr.f32.gmra.mrb[0].mxu0 %v60
    %v648 = vpop.f32.mrb[0].mxu0
    %v649 = vadd.f32 0.0, %v648
    %v650 = vpop.f32.mrb[0].mxu0
    %651 = vmatprep.mubr.f32.mxu0 0.0
    %652 = vmatmul.mubr.f32.gmra.mrb[0].mxu0 %v61
    %v653 = vpop.f32.mrb[0].mxu0
    %v654 = vadd.f32 0.0, %v653
    %v655 = vpop.f32.mrb[0].mxu0
    %656 = vmatprep.mubr.f32.mxu0 0.0
    %657 = vmatmul.mubr.f32.gmra.mrb[0].mxu0 %v62
    %v658 = vpop.f32.mrb[0].mxu0
    %v659 = vadd.f32 0.0, %v658
    %v660 = vpop.f32.mrb[0].mxu0
    %661 = vdwg.mxu0
    %662 = vmatprep.subr.mxu0 0.0
    %663 = vmatpush1.msra.mxu0 1.0
    %664 = vmatprep.subr.mxu0 0.0
    %665 = vmatpush1.msra.mxu0 1.0
    %666 = vmatprep.subr.mxu0 0.0
    %667 = vmatpush1.msra.mxu0 1.0
    %668 = vmatprep.subr.mxu0 0.0
    %669 = vmatpush1.msra.mxu0 1.0
    %670 = vmatprep.subr.mxu0 0.0
    %671 = vmatpush1.msra.mxu0 1.0
    %672 = vmatprep.subr.mxu0 0.0
    %673 = vmatpush1.msra.mxu0 1.0
    %674 = vmatprep.subr.mxu0 0.0
    %675 = vmatpush1.msra.mxu0 1.0
    %676 = vmatprep.subr.mxu0 0.0
    %677 = vmatpush1.msra.mxu0 1.0
    %678 = vmatprep.subr.mxu0 0.0
    %679 = vmatpush1.msra.mxu0 1.0
    %680 = vmatprep.subr.mxu0 0.0
    %681 = vmatpush1.msra.mxu0 1.0
    %682 = vmatprep.subr.mxu0 0.0
    %683 = vmatpush1.msra.mxu0 1.0
    %684 = vmatprep.subr.mxu0 0.0
    %685 = vmatpush1.msra.mxu0 1.0
    %686 = vmatprep.subr.mxu0 0.0
    %687 = vmatpush1.msra.mxu0 1.0
    %688 = vmatprep.subr.mxu0 0.0
    %689 = vmatpush1.msra.mxu0 1.0
    %690 = vmatprep.subr.mxu0 0.0
    %691 = vmatpush1.msra.mxu0 1.0
    %692 = vmatprep.subr.mxu0 0.0
    %693 = vmatpush1.msra.mxu0 1.0
    %694 = vmatprep.subr.mxu0 0.0
    %695 = vmatpush1.msra.mxu0 0.0
    %696 = vmatprep.subr.mxu0 0.0
    %697 = vmatpush1.msra.mxu0 0.0
    %698 = vmatprep.subr.mxu0 0.0
    %699 = vmatpush1.msra.mxu0 0.0
    %700 = vmatprep.subr.mxu0 0.0
    %701 = vmatpush1.msra.mxu0 0.0
    %702 = vmatprep.subr.mxu0 0.0
    %703 = vmatpush1.msra.mxu0 0.0
    %704 = vmatprep.subr.mxu0 0.0
    %705 = vmatpush1.msra.mxu0 0.0
    %706 = vmatprep.subr.mxu0 0.0
    %707 = vmatpush1.msra.mxu0 0.0
    %708 = vmatprep.subr.mxu0 0.0
    %709 = vmatpush1.msra.mxu0 0.0
    %710 = vmatprep.subr.mxu0 0.0
    %711 = vmatpush1.msra.mxu0 0.0
    %712 = vmatprep.subr.mxu0 0.0
    %713 = vmatpush1.msra.mxu0 0.0
    %714 = vmatprep.subr.mxu0 0.0
    %715 = vmatpush1.msra.mxu0 0.0
    %716 = vmatprep.subr.mxu0 0.0
    %717 = vmatpush1.msra.mxu0 0.0
    %718 = vmatprep.subr.mxu0 0.0
    %719 = vmatpush1.msra.mxu0 0.0
    %720 = vmatprep.subr.mxu0 0.0
    %721 = vmatpush1.msra.mxu0 0.0
    %722 = vmatprep.subr.mxu0 0.0
    %723 = vmatpush1.msra.mxu0 0.0
    %724 = vmatprep.subr.mxu0 0.0
    %725 = vmatpush1.msra.mxu0 0.0
    %726 = vmatprep.mubr.f32.mxu0 0.0
    %727 = vmatmul.mubr.f32.gmra.mrb[0].mxu0 %v63
    %v728 = vpop.f32.mrb[0].mxu0
    %v729 = vadd.f32 0.0, %v728
    %v730 = vpop.f32.mrb[0].mxu0
    %731 = vmatprep.mubr.f32.mxu0 0.0
    %732 = vmatmul.mubr.f32.gmra.mrb[0].mxu0 %v64
    %v733 = vpop.f32.mrb[0].mxu0
    %v734 = vadd.f32 0.0, %v733
    %v735 = vpop.f32.mrb[0].mxu0
    %736 = vmatprep.mubr.f32.mxu0 0.0
    %737 = vmatmul.mubr.f32.gmra.mrb[0].mxu0 %v65
    %v738 = vpop.f32.mrb[0].mxu0
    %v739 = vadd.f32 0.0, %v738
    %v740 = vpop.f32.mrb[0].mxu0
    %741 = vmatprep.mubr.f32.mxu0 0.0
    %742 = vmatmul.mubr.f32.gmra.mrb[0].mxu0 %v66
    %v743 = vpop.f32.mrb[0].mxu0
    %v744 = vadd.f32 0.0, %v743
    %v745 = vpop.f32.mrb[0].mxu0
    %746 = vdwg.mxu0
    %v747 = vmul.f32 %v134, 0.0078125
    %v748 = vmul.f32 %v139, 0.0078125
    %v749 = vmul.f32 %v144, 0.0078125
    %v750 = vmul.f32 %v149, 0.0078125
    %v751 = vmul.f32 %v219, 0.0078125
    %v752 = vmul.f32 %v224, 0.0078125
    %v753 = vmul.f32 %v229, 0.0078125
    %v754 = vmul.f32 %v234, 0.0078125
    %v755 = vmul.f32 %v304, 0.0078125
    %v756 = vmul.f32 %v309, 0.0078125
    %v757 = vmul.f32 %v314, 0.0078125
    %v758 = vmul.f32 %v319, 0.0078125
    %v759 = vmul.f32 %v389, 0.0078125
    %v760 = vmul.f32 %v394, 0.0078125
    %v761 = vmul.f32 %v399, 0.0078125
    %v762 = vmul.f32 %v404, 0.0078125
    %v763 = vmul.f32 %v474, 0.0078125
    %v764 = vmul.f32 %v479, 0.0078125
    %v765 = vmul.f32 %v484, 0.0078125
    %v766 = vmul.f32 %v489, 0.0078125
    %v767 = vmul.f32 %v559, 0.0078125
    %v768 = vmul.f32 %v564, 0.0078125
    %v769 = vmul.f32 %v569, 0.0078125
    %v770 = vmul.f32 %v574, 0.0078125
    %v771 = vmul.f32 %v644, 0.0078125
    %v772 = vmul.f32 %v649, 0.0078125
    %v773 = vmul.f32 %v654, 0.0078125
    %v774 = vmul.f32 %v659, 0.0078125
    %v775 = vmul.f32 %v729, 0.0078125
    %v776 = vmul.f32 %v734, 0.0078125
    %v777 = vmul.f32 %v739, 0.0078125
    %v778 = vmul.f32 %v744, 0.0078125
    %v779 = vld [vmem:[%s1] sm:$0xff]
    %v780 = vld [vmem:[%s1 + $0x8] sm:$0xff]
    %v781 = vld [vmem:[%s1 + $0x10] sm:$0xff]
    %v782 = vld [vmem:[%s1 + $0x18] sm:$0xff]
    %v783 = vld [vmem:[%s2] sm:$0x1]
    %v785 = vlaneseq
    %v786 = vshrl.u32 %v785, 7
    %v787 = vsub.s32 0, %v786
    %v788 = vrot.slane %v783, %v787
    %822 = vset.pattern.permute.xlu0 0
    %823 = vperm.xlu0 %822, %v747
    %v824 = vpop.permute.xlu0 %823
    %825 = vset.pattern.permute.xlu0 0
    %826 = vperm.xlu0 %825, %v748
    %v827 = vpop.permute.xlu0 %826
    %828 = vset.pattern.permute.xlu0 0
    %829 = vperm.xlu0 %828, %v749
    %v830 = vpop.permute.xlu0 %829
    %831 = vset.pattern.permute.xlu0 0
    %832 = vperm.xlu0 %831, %v750
    %v833 = vpop.permute.xlu0 %832
    %834 = vset.pattern.permute.xlu0 0
    %835 = vperm.xlu0 %834, %v751
    %v836 = vpop.permute.xlu0 %835
    %837 = vset.pattern.permute.xlu0 0
    %838 = vperm.xlu0 %837, %v752
    %v839 = vpop.permute.xlu0 %838
    %840 = vset.pattern.permute.xlu0 0
    %841 = vperm.xlu0 %840, %v753
    %v842 = vpop.permute.xlu0 %841
    %843 = vset.pattern.permute.xlu0 0
    %844 = vperm.xlu0 %843, %v754
    %v845 = vpop.permute.xlu0 %844
    %846 = vset.pattern.permute.xlu0 0
    %847 = vperm.xlu0 %846, %v755
    %v848 = vpop.permute.xlu0 %847
    %849 = vset.pattern.permute.xlu0 0
    %850 = vperm.xlu0 %849, %v756
    %v851 = vpop.permute.xlu0 %850
    %852 = vset.pattern.permute.xlu0 0
    %853 = vperm.xlu0 %852, %v757
    %v854 = vpop.permute.xlu0 %853
    %855 = vset.pattern.permute.xlu0 0
    %856 = vperm.xlu0 %855, %v758
    %v857 = vpop.permute.xlu0 %856
    %858 = vset.pattern.permute.xlu0 0
    %859 = vperm.xlu0 %858, %v759
    %v860 = vpop.permute.xlu0 %859
    %861 = vset.pattern.permute.xlu0 0
    %862 = vperm.xlu0 %861, %v760
    %v863 = vpop.permute.xlu0 %862
    %864 = vset.pattern.permute.xlu0 0
    %865 = vperm.xlu0 %864, %v761
    %v866 = vpop.permute.xlu0 %865
    %867 = vset.pattern.permute.xlu0 0
    %868 = vperm.xlu0 %867, %v762
    %v869 = vpop.permute.xlu0 %868
    %870 = vset.pattern.permute.xlu0 0
    %871 = vperm.xlu0 %870, %v763
    %v872 = vpop.permute.xlu0 %871
    %873 = vset.pattern.permute.xlu0 0
    %874 = vperm.xlu0 %873, %v764
    %v875 = vpop.permute.xlu0 %874
    %876 = vset.pattern.permute.xlu0 0
    %877 = vperm.xlu0 %876, %v765
    %v878 = vpop.permute.xlu0 %877
    %879 = vset.pattern.permute.xlu0 0
    %880 = vperm.xlu0 %879, %v766
    %v881 = vpop.permute.xlu0 %880
    %882 = vset.pattern.permute.xlu0 0
    %883 = vperm.xlu0 %882, %v767
    %v884 = vpop.permute.xlu0 %883
    %885 = vset.pattern.permute.xlu0 0
    %886 = vperm.xlu0 %885, %v768
    %v887 = vpop.permute.xlu0 %886
    %888 = vset.pattern.permute.xlu0 0
    %889 = vperm.xlu0 %888, %v769
    %v890 = vpop.permute.xlu0 %889
    %891 = vset.pattern.permute.xlu0 0
    %892 = vperm.xlu0 %891, %v770
    %v893 = vpop.permute.xlu0 %892
    %894 = vset.pattern.permute.xlu0 0
    %895 = vperm.xlu0 %894, %v771
    %v896 = vpop.permute.xlu0 %895
    %897 = vset.pattern.permute.xlu0 0
    %898 = vperm.xlu0 %897, %v772
    %v899 = vpop.permute.xlu0 %898
    %900 = vset.pattern.permute.xlu0 0
    %901 = vperm.xlu0 %900, %v773
    %v902 = vpop.permute.xlu0 %901
    %903 = vset.pattern.permute.xlu0 0
    %904 = vperm.xlu0 %903, %v774
    %v905 = vpop.permute.xlu0 %904
    %906 = vset.pattern.permute.xlu0 0
    %907 = vperm.xlu0 %906, %v775
    %v908 = vpop.permute.xlu0 %907
    %909 = vset.pattern.permute.xlu0 0
    %910 = vperm.xlu0 %909, %v776
    %v911 = vpop.permute.xlu0 %910
    %912 = vset.pattern.permute.xlu0 0
    %913 = vperm.xlu0 %912, %v777
    %v914 = vpop.permute.xlu0 %913
    %915 = vset.pattern.permute.xlu0 0
    %916 = vperm.xlu0 %915, %v778
    %v917 = vpop.permute.xlu0 %916
    %v918 = vlaneseq
    %v919 = vand.u32 %v918, 127
    %v920 = vlaneseq
    %v921 = vshrl.u32 %v920, 7
    %v922 = vsub.s32 %v919, %v921
    %v923 = vrot.slane %v824, %v922
    %v924 = vadd.s32 %v919, 4294967288
    %v925 = vlaneseq
    %v926 = vshrl.u32 %v925, 7
    %v927 = vsub.s32 %v924, %v926
    %v928 = vrot.slane %v827, %v927
    %vm929 = vcmask 130112
    %v930 = vsel %vm929, %v928, %v923
    %v931 = vadd.s32 %v919, 4294967280
    %v932 = vlaneseq
    %v933 = vshrl.u32 %v932, 7
    %v934 = vsub.s32 %v931, %v933
    %v935 = vrot.slane %v830, %v934
    %vm936 = vcmask 195712
    %v937 = vsel %vm936, %v935, %v930
    %v938 = vadd.s32 %v919, 4294967272
    %v939 = vlaneseq
    %v940 = vshrl.u32 %v939, 7
    %v941 = vsub.s32 %v938, %v940
    %v942 = vrot.slane %v833, %v941
    %vm943 = vcmask 261312
    %v944 = vsel %vm943, %v942, %v937
    %v945 = vlaneseq
    %v946 = vshrl.u32 %v945, 7
    %v947 = vsub.s32 %v919, %v946
    %v948 = vrot.slane %v836, %v947
    %v949 = vlaneseq
    %v950 = vshrl.u32 %v949, 7
    %v951 = vsub.s32 %v924, %v950
    %v952 = vrot.slane %v839, %v951
    %v953 = vsel %vm929, %v952, %v948
    %v954 = vlaneseq
    %v955 = vshrl.u32 %v954, 7
    %v956 = vsub.s32 %v931, %v955
    %v957 = vrot.slane %v842, %v956
    %v958 = vsel %vm936, %v957, %v953
    %v959 = vlaneseq
    %v960 = vshrl.u32 %v959, 7
    %v961 = vsub.s32 %v938, %v960
    %v962 = vrot.slane %v845, %v961
    %v963 = vsel %vm943, %v962, %v958
    %v964 = vlaneseq
    %v965 = vshrl.u32 %v964, 7
    %v966 = vsub.s32 %v919, %v965
    %v967 = vrot.slane %v848, %v966
    %v968 = vlaneseq
    %v969 = vshrl.u32 %v968, 7
    %v970 = vsub.s32 %v924, %v969
    %v971 = vrot.slane %v851, %v970
    %v972 = vsel %vm929, %v971, %v967
    %v973 = vlaneseq
    %v974 = vshrl.u32 %v973, 7
    %v975 = vsub.s32 %v931, %v974
    %v976 = vrot.slane %v854, %v975
    %v977 = vsel %vm936, %v976, %v972
    %v978 = vlaneseq
    %v979 = vshrl.u32 %v978, 7
    %v980 = vsub.s32 %v938, %v979
    %v981 = vrot.slane %v857, %v980
    %v982 = vsel %vm943, %v981, %v977
    %v983 = vlaneseq
    %v984 = vshrl.u32 %v983, 7
    %v985 = vsub.s32 %v919, %v984
    %v986 = vrot.slane %v860, %v985
    %v987 = vlaneseq
    %v988 = vshrl.u32 %v987, 7
    %v989 = vsub.s32 %v924, %v988
    %v990 = vrot.slane %v863, %v989
    %v991 = vsel %vm929, %v990, %v986
    %v992 = vlaneseq
    %v993 = vshrl.u32 %v992, 7
    %v994 = vsub.s32 %v931, %v993
    %v995 = vrot.slane %v866, %v994
    %v996 = vsel %vm936, %v995, %v991
    %v997 = vlaneseq
    %v998 = vshrl.u32 %v997, 7
    %v999 = vsub.s32 %v938, %v998
    %v1000 = vrot.slane %v869, %v999
    %v1001 = vsel %vm943, %v1000, %v996
    %v1002 = vlaneseq
    %v1003 = vshrl.u32 %v1002, 7
    %v1004 = vsub.s32 %v919, %v1003
    %v1005 = vrot.slane %v872, %v1004
    %v1006 = vlaneseq
    %v1007 = vshrl.u32 %v1006, 7
    %v1008 = vsub.s32 %v924, %v1007
    %v1009 = vrot.slane %v875, %v1008
    %v1010 = vsel %vm929, %v1009, %v1005
    %v1011 = vlaneseq
    %v1012 = vshrl.u32 %v1011, 7
    %v1013 = vsub.s32 %v931, %v1012
    %v1014 = vrot.slane %v878, %v1013
    %v1015 = vsel %vm936, %v1014, %v1010
    %v1016 = vlaneseq
    %v1017 = vshrl.u32 %v1016, 7
    %v1018 = vsub.s32 %v938, %v1017
    %v1019 = vrot.slane %v881, %v1018
    %v1020 = vsel %vm943, %v1019, %v1015
    %v1021 = vlaneseq
    %v1022 = vshrl.u32 %v1021, 7
    %v1023 = vsub.s32 %v919, %v1022
    %v1024 = vrot.slane %v884, %v1023
    %v1025 = vlaneseq
    %v1026 = vshrl.u32 %v1025, 7
    %v1027 = vsub.s32 %v924, %v1026
    %v1028 = vrot.slane %v887, %v1027
    %v1029 = vsel %vm929, %v1028, %v1024
    %v1030 = vlaneseq
    %v1031 = vshrl.u32 %v1030, 7
    %v1032 = vsub.s32 %v931, %v1031
    %v1033 = vrot.slane %v890, %v1032
    %v1034 = vsel %vm936, %v1033, %v1029
    %v1035 = vlaneseq
    %v1036 = vshrl.u32 %v1035, 7
    %v1037 = vsub.s32 %v938, %v1036
    %v1038 = vrot.slane %v893, %v1037
    %v1039 = vsel %vm943, %v1038, %v1034
    %v1040 = vlaneseq
    %v1041 = vshrl.u32 %v1040, 7
    %v1042 = vsub.s32 %v919, %v1041
    %v1043 = vrot.slane %v896, %v1042
    %v1044 = vlaneseq
    %v1045 = vshrl.u32 %v1044, 7
    %v1046 = vsub.s32 %v924, %v1045
    %v1047 = vrot.slane %v899, %v1046
    %v1048 = vsel %vm929, %v1047, %v1043
    %v1049 = vlaneseq
    %v1050 = vshrl.u32 %v1049, 7
    %v1051 = vsub.s32 %v931, %v1050
    %v1052 = vrot.slane %v902, %v1051
    %v1053 = vsel %vm936, %v1052, %v1048
    %v1054 = vlaneseq
    %v1055 = vshrl.u32 %v1054, 7
    %v1056 = vsub.s32 %v938, %v1055
    %v1057 = vrot.slane %v905, %v1056
    %v1058 = vsel %vm943, %v1057, %v1053
    %v1059 = vlaneseq
    %v1060 = vshrl.u32 %v1059, 7
    %v1061 = vsub.s32 %v919, %v1060
    %v1062 = vrot.slane %v908, %v1061
    %v1063 = vlaneseq
    %v1064 = vshrl.u32 %v1063, 7
    %v1065 = vsub.s32 %v924, %v1064
    %v1066 = vrot.slane %v911, %v1065
    %v1067 = vsel %vm929, %v1066, %v1062
    %v1068 = vlaneseq
    %v1069 = vshrl.u32 %v1068, 7
    %v1070 = vsub.s32 %v931, %v1069
    %v1071 = vrot.slane %v914, %v1070
    %v1072 = vsel %vm936, %v1071, %v1067
    %v1073 = vlaneseq
    %v1074 = vshrl.u32 %v1073, 7
    %v1075 = vsub.s32 %v938, %v1074
    %v1076 = vrot.slane %v917, %v1075
    %v1077 = vsel %vm943, %v1076, %v1072
    %vm1078 = vcmask 1041409
    %v1079 = vsel %vm1078, %v963, %v944
    %vm1080 = vcmask 1042434
    %v1081 = vsel %vm1080, %v982, %v1079
    %vm1082 = vcmask 1043459
    %v1083 = vsel %vm1082, %v1001, %v1081
    %vm1084 = vcmask 1044484
    %v1085 = vsel %vm1084, %v1020, %v1083
    %vm1086 = vcmask 1045509
    %v1087 = vsel %vm1086, %v1039, %v1085
    %vm1088 = vcmask 1046534
    %v1089 = vsel %vm1088, %v1058, %v1087
    %vm1090 = vcmask 1047559
    %v1091 = vsel %vm1090, %v1077, %v1089
    %vm1092 = vcmask 261120
    %v1093 = vsel %vm1092, %v1091, 0
    %1095 = vmatprep.subr.mxu0 0.0
    %1096 = vmatpush1.msra.mxu0 %v779
    %1097 = vmatprep.subr.mxu0 0.0
    %1098 = vmatpush1.msra.mxu0 %v780
    %1099 = vmatprep.subr.mxu0 0.0
    %1100 = vmatpush1.msra.mxu0 %v781
    %1101 = vmatprep.subr.mxu0 0.0
    %1102 = vmatpush1.msra.mxu0 %v782
    %1103 = vmatprep.subr.mxu0 0.0
    %1104 = vmatpush1.msra.mxu0 0.0
    %1105 = vmatprep.subr.mxu0 0.0
    %1106 = vmatpush1.msra.mxu0 0.0
    %1107 = vmatprep.subr.mxu0 0.0
    %1108 = vmatpush1.msra.mxu0 0.0
    %1109 = vmatprep.subr.mxu0 0.0
    %1110 = vmatpush1.msra.mxu0 0.0
    %1111 = vmatprep.subr.mxu0 0.0
    %1112 = vmatpush1.msra.mxu0 0.0
    %1113 = vmatprep.subr.mxu0 0.0
    %1114 = vmatpush1.msra.mxu0 0.0
    %1115 = vmatprep.subr.mxu0 0.0
    %1116 = vmatpush1.msra.mxu0 0.0
    %1117 = vmatprep.subr.mxu0 0.0
    %1118 = vmatpush1.msra.mxu0 0.0
    %1119 = vmatprep.subr.mxu0 0.0
    %1120 = vmatpush1.msra.mxu0 0.0
    %1121 = vmatprep.subr.mxu0 0.0
    %1122 = vmatpush1.msra.mxu0 0.0
    %1123 = vmatprep.subr.mxu0 0.0
    %1124 = vmatpush1.msra.mxu0 0.0
    %1125 = vmatprep.subr.mxu0 0.0
    %1126 = vmatpush1.msra.mxu0 0.0
    %1127 = vmatprep.subr.mxu0 0.0
    %1128 = vmatpush1.msra.mxu0 0.0
    %1129 = vmatprep.subr.mxu0 0.0
    %1130 = vmatpush1.msra.mxu0 0.0
    %1131 = vmatprep.subr.mxu0 0.0
    %1132 = vmatpush1.msra.mxu0 0.0
    %1133 = vmatprep.subr.mxu0 0.0
    %1134 = vmatpush1.msra.mxu0 0.0
    %1135 = vmatprep.subr.mxu0 0.0
    %1136 = vmatpush1.msra.mxu0 0.0
    %1137 = vmatprep.subr.mxu0 0.0
    %1138 = vmatpush1.msra.mxu0 0.0
    %1139 = vmatprep.subr.mxu0 0.0
    %1140 = vmatpush1.msra.mxu0 0.0
    %1141 = vmatprep.subr.mxu0 0.0
    %1142 = vmatpush1.msra.mxu0 0.0
    %1143 = vmatprep.subr.mxu0 0.0
    %1144 = vmatpush1.msra.mxu0 0.0
    %1145 = vmatprep.subr.mxu0 0.0
    %1146 = vmatpush1.msra.mxu0 0.0
    %1147 = vmatprep.subr.mxu0 0.0
    %1148 = vmatpush1.msra.mxu0 0.0
    %1149 = vmatprep.subr.mxu0 0.0
    %1150 = vmatpush1.msra.mxu0 0.0
    %1151 = vmatprep.subr.mxu0 0.0
    %1152 = vmatpush1.msra.mxu0 0.0
    %1153 = vmatprep.subr.mxu0 0.0
    %1154 = vmatpush1.msra.mxu0 0.0
    %1155 = vmatprep.subr.mxu0 0.0
    %1156 = vmatpush1.msra.mxu0 0.0
    %1157 = vmatprep.subr.mxu0 0.0
    %1158 = vmatpush1.msra.mxu0 0.0
    %1159 = vmatprep.mubr.f32.mxu0 0.0
    %1160 = vmatmul.mubr.f32.gmra.mrb[0].mxu0 %v1093
    %v1161 = vpop.f32.mrb[0].mxu0
    %v1162 = vadd.f32 %v788, %v1161
    %v1163 = vpop.f32.mrb[0].mxu0
    %1164 = vdwg.mxu0
    %v1165 = vmax.f32 %v1162, 0.0
    %v1166 = vld [vmem:[%s3] sm:$0xff]
    %v1167 = vld [vmem:[%s4] sm:$0x1]
    %v1169 = vlaneseq
    %v1170 = vshrl.u32 %v1169, 7
    %v1171 = vsub.s32 0, %v1170
    %v1172 = vrot.slane %v1167, %v1171
    %vm1174 = vcmask 64512
    %v1176 = vsel %vm1174, %v1165, 0
    %1178 = vmatprep.subr.mxu0 0.0
    %1179 = vmatpush1.msra.mxu0 %v1166
    %1180 = vmatprep.subr.mxu0 0.0
    %1181 = vmatpush1.msra.mxu0 0.0
    %1182 = vmatprep.subr.mxu0 0.0
    %1183 = vmatpush1.msra.mxu0 0.0
    %1184 = vmatprep.subr.mxu0 0.0
    %1185 = vmatpush1.msra.mxu0 0.0
    %1186 = vmatprep.subr.mxu0 0.0
    %1187 = vmatpush1.msra.mxu0 0.0
    %1188 = vmatprep.subr.mxu0 0.0
    %1189 = vmatpush1.msra.mxu0 0.0
    %1190 = vmatprep.subr.mxu0 0.0
    %1191 = vmatpush1.msra.mxu0 0.0
    %1192 = vmatprep.subr.mxu0 0.0
    %1193 = vmatpush1.msra.mxu0 0.0
    %1194 = vmatprep.subr.mxu0 0.0
    %1195 = vmatpush1.msra.mxu0 0.0
    %1196 = vmatprep.subr.mxu0 0.0
    %1197 = vmatpush1.msra.mxu0 0.0
    %1198 = vmatprep.subr.mxu0 0.0
    %1199 = vmatpush1.msra.mxu0 0.0
    %1200 = vmatprep.subr.mxu0 0.0
    %1201 = vmatpush1.msra.mxu0 0.0
    %1202 = vmatprep.subr.mxu0 0.0
    %1203 = vmatpush1.msra.mxu0 0.0
    %1204 = vmatprep.subr.mxu0 0.0
    %1205 = vmatpush1.msra.mxu0 0.0
    %1206 = vmatprep.subr.mxu0 0.0
    %1207 = vmatpush1.msra.mxu0 0.0
    %1208 = vmatprep.subr.mxu0 0.0
    %1209 = vmatpush1.msra.mxu0 0.0
    %1210 = vmatprep.subr.mxu0 0.0
    %1211 = vmatpush1.msra.mxu0 0.0
    %1212 = vmatprep.subr.mxu0 0.0
    %1213 = vmatpush1.msra.mxu0 0.0
    %1214 = vmatprep.subr.mxu0 0.0
    %1215 = vmatpush1.msra.mxu0 0.0
    %1216 = vmatprep.subr.mxu0 0.0
    %1217 = vmatpush1.msra.mxu0 0.0
    %1218 = vmatprep.subr.mxu0 0.0
    %1219 = vmatpush1.msra.mxu0 0.0
    %1220 = vmatprep.subr.mxu0 0.0
    %1221 = vmatpush1.msra.mxu0 0.0
    %1222 = vmatprep.subr.mxu0 0.0
    %1223 = vmatpush1.msra.mxu0 0.0
    %1224 = vmatprep.subr.mxu0 0.0
    %1225 = vmatpush1.msra.mxu0 0.0
    %1226 = vmatprep.subr.mxu0 0.0
    %1227 = vmatpush1.msra.mxu0 0.0
    %1228 = vmatprep.subr.mxu0 0.0
    %1229 = vmatpush1.msra.mxu0 0.0
    %1230 = vmatprep.subr.mxu0 0.0
    %1231 = vmatpush1.msra.mxu0 0.0
    %1232 = vmatprep.subr.mxu0 0.0
    %1233 = vmatpush1.msra.mxu0 0.0
    %1234 = vmatprep.subr.mxu0 0.0
    %1235 = vmatpush1.msra.mxu0 0.0
    %1236 = vmatprep.subr.mxu0 0.0
    %1237 = vmatpush1.msra.mxu0 0.0
    %1238 = vmatprep.subr.mxu0 0.0
    %1239 = vmatpush1.msra.mxu0 0.0
    %1240 = vmatprep.subr.mxu0 0.0
    %1241 = vmatpush1.msra.mxu0 0.0
    %1242 = vmatprep.mubr.f32.mxu0 0.0
    %1243 = vmatmul.mubr.f32.gmra.mrb[0].mxu0 %v1176
    %v1244 = vpop.f32.mrb[0].mxu0
    %v1245 = vadd.f32 %v1172, %v1244
    %v1246 = vpop.f32.mrb[0].mxu0
    %1247 = vdwg.mxu0
    %v1248 = vxor.u32 %v1245, 2147483648
    %v1249 = vmul.f32 %v1248, 1.442695
    %v1250 = vpow.pop %v1249
    %v1251 = vadd.f32 %v1250, 1.0
    %v1252 = vrcp.pop %v1251
    %v1253 = vmul.f32 1.0, %v1252
    %v1254 = vlaneseq
    %v1255 = vshrl.u32 %v1254, 7
    %v1256 = vsub.s32 0, %v1255
    %v1257 = vrot.slane %v1253, %v1256
    %1259 = vbcast.lane.b32.xlu0 %v1257, 256
    %v1260 = vpop.permute.xlu0 %1259
    %s1262 = sor.u32 256, 8
    %1263 = vbcast.lane.b32.xlu0 %v1257, %s1262
    %v1264 = vpop.permute.xlu0 %1263
    %s1266 = sor.u32 256, 16
    %1267 = vbcast.lane.b32.xlu0 %v1257, %s1266
    %v1268 = vpop.permute.xlu0 %1267
    %s1270 = sor.u32 256, 24
    %1271 = vbcast.lane.b32.xlu0 %v1257, %s1270
    %v1272 = vpop.permute.xlu0 %1271
    %v1273 = vlaneseq
    %v1274 = vshrl.u32 %v1273, 7
    %v1275 = vsub.s32 1, %v1274
    %v1276 = vrot.slane %v1253, %v1275
    %1278 = vbcast.lane.b32.xlu0 %v1276, 256
    %v1279 = vpop.permute.xlu0 %1278
    %s1281 = sor.u32 256, 8
    %1282 = vbcast.lane.b32.xlu0 %v1276, %s1281
    %v1283 = vpop.permute.xlu0 %1282
    %s1285 = sor.u32 256, 16
    %1286 = vbcast.lane.b32.xlu0 %v1276, %s1285
    %v1287 = vpop.permute.xlu0 %1286
    %s1289 = sor.u32 256, 24
    %1290 = vbcast.lane.b32.xlu0 %v1276, %s1289
    %v1291 = vpop.permute.xlu0 %1290
    %v1292 = vlaneseq
    %v1293 = vshrl.u32 %v1292, 7
    %v1294 = vsub.s32 2, %v1293
    %v1295 = vrot.slane %v1253, %v1294
    %1297 = vbcast.lane.b32.xlu0 %v1295, 256
    %v1298 = vpop.permute.xlu0 %1297
    %s1300 = sor.u32 256, 8
    %1301 = vbcast.lane.b32.xlu0 %v1295, %s1300
    %v1302 = vpop.permute.xlu0 %1301
    %s1304 = sor.u32 256, 16
    %1305 = vbcast.lane.b32.xlu0 %v1295, %s1304
    %v1306 = vpop.permute.xlu0 %1305
    %s1308 = sor.u32 256, 24
    %1309 = vbcast.lane.b32.xlu0 %v1295, %s1308
    %v1310 = vpop.permute.xlu0 %1309
    %v1311 = vlaneseq
    %v1312 = vshrl.u32 %v1311, 7
    %v1313 = vsub.s32 3, %v1312
    %v1314 = vrot.slane %v1253, %v1313
    %1316 = vbcast.lane.b32.xlu0 %v1314, 256
    %v1317 = vpop.permute.xlu0 %1316
    %s1319 = sor.u32 256, 8
    %1320 = vbcast.lane.b32.xlu0 %v1314, %s1319
    %v1321 = vpop.permute.xlu0 %1320
    %s1323 = sor.u32 256, 16
    %1324 = vbcast.lane.b32.xlu0 %v1314, %s1323
    %v1325 = vpop.permute.xlu0 %1324
    %s1327 = sor.u32 256, 24
    %1328 = vbcast.lane.b32.xlu0 %v1314, %s1327
    %v1329 = vpop.permute.xlu0 %1328
    %v1330 = vlaneseq
    %v1331 = vshrl.u32 %v1330, 7
    %v1332 = vsub.s32 4, %v1331
    %v1333 = vrot.slane %v1253, %v1332
    %1335 = vbcast.lane.b32.xlu0 %v1333, 256
    %v1336 = vpop.permute.xlu0 %1335
    %s1338 = sor.u32 256, 8
    %1339 = vbcast.lane.b32.xlu0 %v1333, %s1338
    %v1340 = vpop.permute.xlu0 %1339
    %s1342 = sor.u32 256, 16
    %1343 = vbcast.lane.b32.xlu0 %v1333, %s1342
    %v1344 = vpop.permute.xlu0 %1343
    %s1346 = sor.u32 256, 24
    %1347 = vbcast.lane.b32.xlu0 %v1333, %s1346
    %v1348 = vpop.permute.xlu0 %1347
    %v1349 = vlaneseq
    %v1350 = vshrl.u32 %v1349, 7
    %v1351 = vsub.s32 5, %v1350
    %v1352 = vrot.slane %v1253, %v1351
    %1354 = vbcast.lane.b32.xlu0 %v1352, 256
    %v1355 = vpop.permute.xlu0 %1354
    %s1357 = sor.u32 256, 8
    %1358 = vbcast.lane.b32.xlu0 %v1352, %s1357
    %v1359 = vpop.permute.xlu0 %1358
    %s1361 = sor.u32 256, 16
    %1362 = vbcast.lane.b32.xlu0 %v1352, %s1361
    %v1363 = vpop.permute.xlu0 %1362
    %s1365 = sor.u32 256, 24
    %1366 = vbcast.lane.b32.xlu0 %v1352, %s1365
    %v1367 = vpop.permute.xlu0 %1366
    %v1368 = vlaneseq
    %v1369 = vshrl.u32 %v1368, 7
    %v1370 = vsub.s32 6, %v1369
    %v1371 = vrot.slane %v1253, %v1370
    %1373 = vbcast.lane.b32.xlu0 %v1371, 256
    %v1374 = vpop.permute.xlu0 %1373
    %s1376 = sor.u32 256, 8
    %1377 = vbcast.lane.b32.xlu0 %v1371, %s1376
    %v1378 = vpop.permute.xlu0 %1377
    %s1380 = sor.u32 256, 16
    %1381 = vbcast.lane.b32.xlu0 %v1371, %s1380
    %v1382 = vpop.permute.xlu0 %1381
    %s1384 = sor.u32 256, 24
    %1385 = vbcast.lane.b32.xlu0 %v1371, %s1384
    %v1386 = vpop.permute.xlu0 %1385
    %v1387 = vlaneseq
    %v1388 = vshrl.u32 %v1387, 7
    %v1389 = vsub.s32 7, %v1388
    %v1390 = vrot.slane %v1253, %v1389
    %1392 = vbcast.lane.b32.xlu0 %v1390, 256
    %v1393 = vpop.permute.xlu0 %1392
    %s1395 = sor.u32 256, 8
    %1396 = vbcast.lane.b32.xlu0 %v1390, %s1395
    %v1397 = vpop.permute.xlu0 %1396
    %s1399 = sor.u32 256, 16
    %1400 = vbcast.lane.b32.xlu0 %v1390, %s1399
    %v1401 = vpop.permute.xlu0 %1400
    %s1403 = sor.u32 256, 24
    %1404 = vbcast.lane.b32.xlu0 %v1390, %s1403
    %v1405 = vpop.permute.xlu0 %1404
    %v1406 = vmul.f32 %v35, %v1260
    %v1407 = vmul.f32 %v36, %v1264
    %v1408 = vmul.f32 %v37, %v1268
    %v1409 = vmul.f32 %v38, %v1272
    %v1410 = vmul.f32 %v39, %v1279
    %v1411 = vmul.f32 %v40, %v1283
    %v1412 = vmul.f32 %v41, %v1287
    %v1413 = vmul.f32 %v42, %v1291
    %v1414 = vmul.f32 %v43, %v1298
    %v1415 = vmul.f32 %v44, %v1302
    %v1416 = vmul.f32 %v45, %v1306
    %v1417 = vmul.f32 %v46, %v1310
    %v1418 = vmul.f32 %v47, %v1317
    %v1419 = vmul.f32 %v48, %v1321
    %v1420 = vmul.f32 %v49, %v1325
    %v1421 = vmul.f32 %v50, %v1329
    %v1422 = vmul.f32 %v51, %v1336
    %v1423 = vmul.f32 %v52, %v1340
    %v1424 = vmul.f32 %v53, %v1344
    %v1425 = vmul.f32 %v54, %v1348
    %v1426 = vmul.f32 %v55, %v1355
    %v1427 = vmul.f32 %v56, %v1359
    %v1428 = vmul.f32 %v57, %v1363
    %v1429 = vmul.f32 %v58, %v1367
    %v1430 = vmul.f32 %v59, %v1374
    %v1431 = vmul.f32 %v60, %v1378
    %v1432 = vmul.f32 %v61, %v1382
    %v1433 = vmul.f32 %v62, %v1386
    %v1434 = vmul.f32 %v63, %v1393
    %v1435 = vmul.f32 %v64, %v1397
    %v1436 = vmul.f32 %v65, %v1401
    %v1437 = vmul.f32 %v66, %v1405
    %1438 = vst [vmem:[#allocation5] sm:$0xff] %v1406
    %1439 = vst [vmem:[#allocation5 + $0x8] sm:$0xff] %v1407
    %1440 = vst [vmem:[#allocation5 + $0x10] sm:$0xff] %v1408
    %1441 = vst [vmem:[#allocation5 + $0x18] sm:$0xff] %v1409
    %1442 = vst [vmem:[#allocation5 + $0x20] sm:$0xff] %v1410
    %1443 = vst [vmem:[#allocation5 + $0x28] sm:$0xff] %v1411
    %1444 = vst [vmem:[#allocation5 + $0x30] sm:$0xff] %v1412
    %1445 = vst [vmem:[#allocation5 + $0x38] sm:$0xff] %v1413
    %1446 = vst [vmem:[#allocation5 + $0x40] sm:$0xff] %v1414
    %1447 = vst [vmem:[#allocation5 + $0x48] sm:$0xff] %v1415
    %1448 = vst [vmem:[#allocation5 + $0x50] sm:$0xff] %v1416
    %1449 = vst [vmem:[#allocation5 + $0x58] sm:$0xff] %v1417
    %1450 = vst [vmem:[#allocation5 + $0x60] sm:$0xff] %v1418
    %1451 = vst [vmem:[#allocation5 + $0x68] sm:$0xff] %v1419
    %1452 = vst [vmem:[#allocation5 + $0x70] sm:$0xff] %v1420
    %1453 = vst [vmem:[#allocation5 + $0x78] sm:$0xff] %v1421
    %1454 = vst [vmem:[#allocation5 + $0x80] sm:$0xff] %v1422
    %1455 = vst [vmem:[#allocation5 + $0x88] sm:$0xff] %v1423
    %1456 = vst [vmem:[#allocation5 + $0x90] sm:$0xff] %v1424
    %1457 = vst [vmem:[#allocation5 + $0x98] sm:$0xff] %v1425
    %1458 = vst [vmem:[#allocation5 + $0xa0] sm:$0xff] %v1426
    %1459 = vst [vmem:[#allocation5 + $0xa8] sm:$0xff] %v1427
    %1460 = vst [vmem:[#allocation5 + $0xb0] sm:$0xff] %v1428
    %1461 = vst [vmem:[#allocation5 + $0xb8] sm:$0xff] %v1429
    %1462 = vst [vmem:[#allocation5 + $0xc0] sm:$0xff] %v1430
    %1463 = vst [vmem:[#allocation5 + $0xc8] sm:$0xff] %v1431
    %1464 = vst [vmem:[#allocation5 + $0xd0] sm:$0xff] %v1432
    %1465 = vst [vmem:[#allocation5 + $0xd8] sm:$0xff] %v1433
    %1466 = vst [vmem:[#allocation5 + $0xe0] sm:$0xff] %v1434
    %1467 = vst [vmem:[#allocation5 + $0xe8] sm:$0xff] %v1435
    %1468 = vst [vmem:[#allocation5 + $0xf0] sm:$0xff] %v1436
    %1469 = vst [vmem:[#allocation5 + $0xf8] sm:$0xff] %v1437
    // Predicated region
    $region26: #{tpu_custom_call.1} parent=1 // pred_check
      _
    $region27: #{tpu_custom_call.1} parent=1 // pred_check_branch
      %1471 = sbr.rel (0) target = $region29
    $region28: #{tpu_custom_call.1} parent=1 // pred_region
      %s1473 = ssub.s32 4096, 4096
      %1474 = vsyncadd [#allocation4], %s1473
      %s1475 = sshll.u32 [#allocation5], 4
      %s1476 = int_to_ptr.vmem [resolvable:$true] %s1475
      %1481 = dma.vmem_to_hbm [thread:$0]  %s1476, 4096, %s5, [#allocation4], 128, 128, 8
    $region29: #{tpu_custom_call.1} parent=1 // pred_fallthru
      _
    // Predicated region
    $region30: #{tpu_custom_call.1} parent=1 // pred_check
      _
    $region31: #{tpu_custom_call.1} parent=1 // pred_check_branch
      %1483 = sbr.rel (0) target = $region33
    $region32: #{tpu_custom_call.1} parent=1 // pred_region
      %1484 = dma.done [#allocation4], 4096
    $region33: #{tpu_custom_call.1} parent=1 // pred_fallthru
      _
    %1485 = vsyncpa [#allocation3], 1
    %1486 = vsyncpa [#allocation4], 1

</llo_original>
